<compile_context>
chip_gen: v5e
topology: v5e:2x2
jax: 0.10.0
libtpu: 0.0.40
codegen_flags: <defaults>
</compile_context>

<pallas_src>
import functools

import jax
import jax.numpy as jnp
from jax.experimental import pallas as pl
from jax.experimental.pallas import tpu as pltpu


def _gatv2_block(x, adj, w_lr, att_col, bias, *, apply_relu):
    """One GATv2Conv layer (heads=1) on VMEM-resident values.

    x       : [N, Fin]   node features
    adj     : [N, N]     adj[i, j] = 1 iff edge j -> i (self-loops included)
    w_lr    : [Fin, 2C]  concat(W_l, W_r)
    att_col : [C, 1]     attention vector (column layout for the MXU)
    bias    : [1, C]
    """
    N = x.shape[0]
    C = bias.shape[-1]

    # One wide MXU matmul for both linear maps, then lane-aligned split.
    xlr = jnp.dot(x, w_lr, preferred_element_type=jnp.float32)      # [N, 2C]
    xl = xlr[:, :C]                                                  # source
    xr = xlr[:, C:]                                                  # target

    # Pairwise pre-activation z[i, j, c] = xl[j, c] + xr[i, c]  (GATv2).
    z = xl[None, :, :] + xr[:, None, :]                              # [N, N, C]
    z = jnp.where(z > 0, z, 0.2 * z)                                 # LeakyReLU(0.2)

    # Attention scores via the MXU: [N*N, C] @ [C, 1] -> [N*N, 1].
    s = jnp.dot(z.reshape(N * N, C), att_col,
                preferred_element_type=jnp.float32).reshape(N, N)    # [N, N]

    # Masked softmax over incoming edges of each target node (row-wise).
    s = jnp.where(adj > 0, s, -1e30)
    m = jnp.max(s, axis=-1, keepdims=True)
    e = jnp.exp(s - m)                                 # masked entries -> 0
    denom = jnp.maximum(jnp.sum(e, axis=-1, keepdims=True), 1e-20)
    alpha = e * pl.reciprocal(denom, approx=True)                    # [N, N]

    out = jnp.dot(alpha, xl, preferred_element_type=jnp.float32) + bias
    if apply_relu:
        out = jnp.maximum(out, 0.0)
    return out


def gat_fused_kernel(x_ref, adj_ref,
                     wlr1_ref, att1_ref, b1_ref,
                     wlr2_ref, att2_ref, b2_ref,
                     out_ref):
    """conv1 -> ReLU -> conv2, fully fused; h stays in VMEM."""
    x = x_ref[...].astype(jnp.float32)
    adj = adj_ref[...]

    h = _gatv2_block(x, adj, wlr1_ref[...], att1_ref[...], b1_ref[...],
                     apply_relu=True)
    out = _gatv2_block(h, adj, wlr2_ref[...], att2_ref[...], b2_ref[...],
                       apply_relu=False)
    out_ref[...] = out.astype(out_ref.dtype)


def _full_spec(shape):
    nd = len(shape)
    return pl.BlockSpec(shape, lambda i, _nd=nd: (0,) * _nd)


def gat_forward(x, adj, params):
    """GAT.forward with padded / fused weights and a single pallas_call."""
    (wl1, wr1, att1, b1), (wl2, wr2, att2, b2) = params
    N, Fin = x.shape
    C = wl1.shape[1]                       # 250
    CP = ((C + 127) // 128) * 128          # 256 (lane-dense)

    def pad_cols(a):
        p = CP - a.shape[-1]
        return jnp.pad(a, ((0, 0), (0, p))) if p else a

    def pad_rows(a):
        p = CP - a.shape[0]
        return jnp.pad(a, ((0, p), (0, 0))) if p else a

    # Layer 1 (in=Fin, out=C): concat W_l|W_r, pad out-channels to CP.
    wlr1 = jnp.concatenate([pad_cols(wl1), pad_cols(wr1)], axis=1)   # [Fin, 2CP]
    att1c = pad_cols(att1).T                                         # [CP, 1]
    b1p = pad_cols(b1)                                               # [1, CP]

    # Layer 2 (in=C, out=C): pad both in- and out-channels to CP.
    wlr2 = jnp.concatenate([pad_cols(pad_rows(wl2)),
                            pad_cols(pad_rows(wr2))], axis=1)        # [CP, 2CP]
    att2c = pad_cols(att2).T                                         # [CP, 1]
    b2p = pad_cols(b2)                                               # [1, CP]

    out_padded = pl.pallas_call(
        gat_fused_kernel,
        grid=(1,),
        out_shape=jax.ShapeDtypeStruct((N, CP), jnp.float32),
        in_specs=[
            _full_spec((N, Fin)),     # x
            _full_spec((N, N)),       # adjacency mask
            _full_spec((Fin, 2 * CP)),  # W_l | W_r  (layer 1)
            _full_spec((CP, 1)),      # att1
            _full_spec((1, CP)),      # bias1
            _full_spec((CP, 2 * CP)),   # W_l | W_r  (layer 2)
            _full_spec((CP, 1)),      # att2
            _full_spec((1, CP)),      # bias2
        ],
        out_specs=_full_spec((N, CP)),
        compiler_params=pltpu.CompilerParams(
            dimension_semantics=("arbitrary",)),
    )(x, adj, wlr1, att1c, b1p, wlr2, att2c, b2p)

    return out_padded[:, :C]


if __name__ == "__main__":
    key = jax.random.PRNGKey(0)
    N, F_IN, C = 16, 32, 250   # small node count / input features; 250 fixed by module

    # Deterministic graph: bidirectional ring + a few chords -> edge_index [2, E]
    src, dst = [], []
    for i in range(N):
        src += [i, (i + 1) % N]
        dst += [(i + 1) % N, i]
    for i in range(0, N, 3):
        j = (i + 5) % N
        src += [i, j]
        dst += [j, i]
    edge_index = jnp.array([src, dst], dtype=jnp.int32)

    # Dense adjacency mask: adj[i, j] = 1 iff edge j -> i; plus self loops.
    adj = jnp.zeros((N, N), jnp.float32)
    adj = adj.at[edge_index[1], edge_index[0]].set(1.0)
    adj = jnp.maximum(adj, jnp.eye(N, dtype=jnp.float32))

    keys = jax.random.split(key, 8)

    def glorot(k, shape):
        fan_in, fan_out = shape
        std = (2.0 / (fan_in + fan_out)) ** 0.5
        return jax.random.normal(k, shape, jnp.float32) * std

    x = jax.random.normal(keys[0], (N, F_IN), jnp.float32)

    # conv1: in_channels=-1 (lazy -> F_IN), out_channels=250, heads=1, concat=True
    wl1 = glorot(keys[1], (F_IN, C))
    wr1 = glorot(keys[2], (F_IN, C))
    att1 = glorot(keys[3], (1, C))
    b1 = jnp.zeros((1, C), jnp.float32)          # PyG bias init = zeros

    # conv2: in_channels=250, out_channels=250, heads=1, concat=False
    wl2 = glorot(keys[4], (C, C))
    wr2 = glorot(keys[5], (C, C))
    att2 = glorot(keys[6], (1, C))
    b2 = jnp.zeros((1, C), jnp.float32)

    params = ((wl1, wr1, att1, b1), (wl2, wr2, att2, b2))

    out = gat_forward(x, adj, params)
    out = jax.block_until_ready(out)
    assert out.shape == (N, C) and out.dtype == jnp.float32
    assert bool(jnp.all(jnp.isfinite(out)))
    print("KERNEL_OK")
</pallas_src>

<mosaic_0001>
module attributes {stable_mosaic.version = 11 : i64} {
  func.func @gat_fused_kernel(%arg0: i32, %arg1: memref<16x32xf32, #tpu.memory_space<vmem>>, %arg2: memref<16x16xf32, #tpu.memory_space<vmem>>, %arg3: memref<32x512xf32, #tpu.memory_space<vmem>>, %arg4: memref<256x1xf32, #tpu.memory_space<vmem>>, %arg5: memref<1x256xf32, #tpu.memory_space<vmem>>, %arg6: memref<256x512xf32, #tpu.memory_space<vmem>>, %arg7: memref<256x1xf32, #tpu.memory_space<vmem>>, %arg8: memref<1x256xf32, #tpu.memory_space<vmem>>, %arg9: memref<16x256xf32, #tpu.memory_space<vmem>>) attributes {dimension_semantics = [#tpu.dimension_semantics<arbitrary>], iteration_bounds = array<i64: 1>, scalar_prefetch = 0 : i64, scratch_operands = 0 : i64, tpu.core_type = #tpu.core_type<tc>, window_params = [{pipeline_mode = #tpu.pipeline_mode<synchronous>, transform_indices = @transform_0, window_bounds = array<i64: 16, 32>}, {pipeline_mode = #tpu.pipeline_mode<synchronous>, transform_indices = @transform_1, window_bounds = array<i64: 16, 16>}, {pipeline_mode = #tpu.pipeline_mode<synchronous>, transform_indices = @transform_2, window_bounds = array<i64: 32, 512>}, {pipeline_mode = #tpu.pipeline_mode<synchronous>, transform_indices = @transform_3, window_bounds = array<i64: 256, 1>}, {pipeline_mode = #tpu.pipeline_mode<synchronous>, transform_indices = @transform_4, window_bounds = array<i64: 1, 256>}, {pipeline_mode = #tpu.pipeline_mode<synchronous>, transform_indices = @transform_5, window_bounds = array<i64: 256, 512>}, {pipeline_mode = #tpu.pipeline_mode<synchronous>, transform_indices = @transform_6, window_bounds = array<i64: 256, 1>}, {pipeline_mode = #tpu.pipeline_mode<synchronous>, transform_indices = @transform_7, window_bounds = array<i64: 1, 256>}, {pipeline_mode = #tpu.pipeline_mode<synchronous>, transform_indices = @transform_8, window_bounds = array<i64: 16, 256>}]} {
    %c0 = arith.constant 0 : index
    %c0_0 = arith.constant 0 : index
    %0 = vector.load %arg1[%c0, %c0_0] : memref<16x32xf32, #tpu.memory_space<vmem>>, vector<16x32xf32>
    %c0_1 = arith.constant 0 : index
    %c0_2 = arith.constant 0 : index
    %1 = vector.load %arg2[%c0_1, %c0_2] : memref<16x16xf32, #tpu.memory_space<vmem>>, vector<16x16xf32>
    %c0_3 = arith.constant 0 : index
    %c0_4 = arith.constant 0 : index
    %2 = vector.load %arg3[%c0_3, %c0_4] : memref<32x512xf32, #tpu.memory_space<vmem>>, vector<32x512xf32>
    %c0_5 = arith.constant 0 : index
    %c0_6 = arith.constant 0 : index
    %3 = vector.load %arg4[%c0_5, %c0_6] : memref<256x1xf32, #tpu.memory_space<vmem>>, vector<256x1xf32>
    %c0_7 = arith.constant 0 : index
    %c0_8 = arith.constant 0 : index
    %4 = vector.load %arg5[%c0_7, %c0_8] : memref<1x256xf32, #tpu.memory_space<vmem>>, vector<1x256xf32>
    %cst = arith.constant dense<0.000000e+00> : vector<16x512xf32>
    %5 = tpu.matmul %0, %2, %cst {dimension_numbers = #tpu.dot_dimension_numbers<[1], [0], [0], [1], [0, 0, 1, 1], [], []>} : vector<16x32xf32>, vector<32x512xf32>, vector<16x512xf32> -> vector<16x512xf32>
    %6 = vector.extract_strided_slice %5 {offsets = [0, 0], sizes = [16, 256], strides = [1, 1]} : vector<16x512xf32> to vector<16x256xf32>
    %7 = vector.extract_strided_slice %5 {offsets = [0, 256], sizes = [16, 256], strides = [1, 1]} : vector<16x512xf32> to vector<16x256xf32>
    %8 = vector.shape_cast %6 : vector<16x256xf32> to vector<1x16x256xf32>
    %9 = vector.shape_cast %7 : vector<16x256xf32> to vector<16x1x256xf32>
    %10 = vector.broadcast %8 : vector<1x16x256xf32> to vector<16x16x256xf32>
    %11 = vector.broadcast %9 : vector<16x1x256xf32> to vector<16x16x256xf32>
    %12 = arith.addf %10, %11 : vector<16x16x256xf32>
    %cst_9 = arith.constant 0.000000e+00 : f32
    %13 = vector.broadcast %cst_9 : f32 to vector<16x16x256xf32>
    %14 = arith.cmpf ogt, %12, %13 : vector<16x16x256xf32>
    %cst_10 = arith.constant 2.000000e-01 : f32
    %15 = vector.broadcast %cst_10 : f32 to vector<16x16x256xf32>
    %16 = arith.mulf %15, %12 : vector<16x16x256xf32>
    %17 = arith.select %14, %12, %16 : vector<16x16x256xi1>, vector<16x16x256xf32>
    %18 = vector.shape_cast %17 : vector<16x16x256xf32> to vector<256x256xf32>
    %cst_11 = arith.constant dense<0.000000e+00> : vector<256x1xf32>
    %19 = tpu.matmul %18, %3, %cst_11 {dimension_numbers = #tpu.dot_dimension_numbers<[1], [0], [0], [1], [0, 0, 1, 1], [], []>} : vector<256x256xf32>, vector<256x1xf32>, vector<256x1xf32> -> vector<256x1xf32>
    %20 = vector.shape_cast %19 : vector<256x1xf32> to vector<16x16xf32>
    %cst_12 = arith.constant 0.000000e+00 : f32
    %21 = vector.broadcast %cst_12 : f32 to vector<16x16xf32>
    %22 = arith.cmpf ogt, %1, %21 : vector<16x16xf32>
    %cst_13 = arith.constant -1.000000e+30 : f32
    %23 = vector.broadcast %cst_13 : f32 to vector<16x16xf32>
    %24 = arith.select %22, %20, %23 : vector<16x16xi1>, vector<16x16xf32>
    %cst_14 = arith.constant dense<0xFF800000> : vector<16xf32>
    %25 = vector.multi_reduction <maximumf>, %24, %cst_14 [1] : vector<16x16xf32> to vector<16xf32>
    %26 = vector.shape_cast %25 : vector<16xf32> to vector<16x1xf32>
    %27 = vector.broadcast %26 : vector<16x1xf32> to vector<16x16xf32>
    %28 = arith.subf %24, %27 : vector<16x16xf32>
    %29 = math.exp %28 : vector<16x16xf32>
    %cst_15 = arith.constant dense<0.000000e+00> : vector<16xf32>
    %30 = vector.multi_reduction <add>, %29, %cst_15 [1] : vector<16x16xf32> to vector<16xf32>
    %31 = vector.shape_cast %30 : vector<16xf32> to vector<16x1xf32>
    %cst_16 = arith.constant 9.99999968E-21 : f32
    %32 = vector.broadcast %cst_16 : f32 to vector<16x1xf32>
    %33 = arith.maximumf %31, %32 : vector<16x1xf32>
    %34 = tpu.reciprocal %33 {approx = true} : vector<16x1xf32> -> vector<16x1xf32>
    %35 = vector.broadcast %34 : vector<16x1xf32> to vector<16x16xf32>
    %36 = arith.mulf %29, %35 : vector<16x16xf32>
    %cst_17 = arith.constant dense<0.000000e+00> : vector<16x256xf32>
    %37 = tpu.matmul %36, %6, %cst_17 {dimension_numbers = #tpu.dot_dimension_numbers<[1], [0], [0], [1], [0, 0, 1, 1], [], []>} : vector<16x16xf32>, vector<16x256xf32>, vector<16x256xf32> -> vector<16x256xf32>
    %38 = vector.broadcast %4 : vector<1x256xf32> to vector<16x256xf32>
    %39 = arith.addf %37, %38 : vector<16x256xf32>
    %cst_18 = arith.constant 0.000000e+00 : f32
    %40 = vector.broadcast %cst_18 : f32 to vector<16x256xf32>
    %41 = arith.maximumf %39, %40 : vector<16x256xf32>
    %c0_19 = arith.constant 0 : index
    %c0_20 = arith.constant 0 : index
    %42 = vector.load %arg6[%c0_19, %c0_20] : memref<256x512xf32, #tpu.memory_space<vmem>>, vector<256x512xf32>
    %c0_21 = arith.constant 0 : index
    %c0_22 = arith.constant 0 : index
    %43 = vector.load %arg7[%c0_21, %c0_22] : memref<256x1xf32, #tpu.memory_space<vmem>>, vector<256x1xf32>
    %c0_23 = arith.constant 0 : index
    %c0_24 = arith.constant 0 : index
    %44 = vector.load %arg8[%c0_23, %c0_24] : memref<1x256xf32, #tpu.memory_space<vmem>>, vector<1x256xf32>
    %cst_25 = arith.constant dense<0.000000e+00> : vector<16x512xf32>
    %45 = tpu.matmul %41, %42, %cst_25 {dimension_numbers = #tpu.dot_dimension_numbers<[1], [0], [0], [1], [0, 0, 1, 1], [], []>} : vector<16x256xf32>, vector<256x512xf32>, vector<16x512xf32> -> vector<16x512xf32>
    %46 = vector.extract_strided_slice %45 {offsets = [0, 0], sizes = [16, 256], strides = [1, 1]} : vector<16x512xf32> to vector<16x256xf32>
    %47 = vector.extract_strided_slice %45 {offsets = [0, 256], sizes = [16, 256], strides = [1, 1]} : vector<16x512xf32> to vector<16x256xf32>
    %48 = vector.shape_cast %46 : vector<16x256xf32> to vector<1x16x256xf32>
    %49 = vector.shape_cast %47 : vector<16x256xf32> to vector<16x1x256xf32>
    %50 = vector.broadcast %48 : vector<1x16x256xf32> to vector<16x16x256xf32>
    %51 = vector.broadcast %49 : vector<16x1x256xf32> to vector<16x16x256xf32>
    %52 = arith.addf %50, %51 : vector<16x16x256xf32>
    %cst_26 = arith.constant 0.000000e+00 : f32
    %53 = vector.broadcast %cst_26 : f32 to vector<16x16x256xf32>
    %54 = arith.cmpf ogt, %52, %53 : vector<16x16x256xf32>
    %cst_27 = arith.constant 2.000000e-01 : f32
    %55 = vector.broadcast %cst_27 : f32 to vector<16x16x256xf32>
    %56 = arith.mulf %55, %52 : vector<16x16x256xf32>
    %57 = arith.select %54, %52, %56 : vector<16x16x256xi1>, vector<16x16x256xf32>
    %58 = vector.shape_cast %57 : vector<16x16x256xf32> to vector<256x256xf32>
    %cst_28 = arith.constant dense<0.000000e+00> : vector<256x1xf32>
    %59 = tpu.matmul %58, %43, %cst_28 {dimension_numbers = #tpu.dot_dimension_numbers<[1], [0], [0], [1], [0, 0, 1, 1], [], []>} : vector<256x256xf32>, vector<256x1xf32>, vector<256x1xf32> -> vector<256x1xf32>
    %60 = vector.shape_cast %59 : vector<256x1xf32> to vector<16x16xf32>
    %cst_29 = arith.constant 0.000000e+00 : f32
    %61 = vector.broadcast %cst_29 : f32 to vector<16x16xf32>
    %62 = arith.cmpf ogt, %1, %61 : vector<16x16xf32>
    %cst_30 = arith.constant -1.000000e+30 : f32
    %63 = vector.broadcast %cst_30 : f32 to vector<16x16xf32>
    %64 = arith.select %62, %60, %63 : vector<16x16xi1>, vector<16x16xf32>
    %cst_31 = arith.constant dense<0xFF800000> : vector<16xf32>
    %65 = vector.multi_reduction <maximumf>, %64, %cst_31 [1] : vector<16x16xf32> to vector<16xf32>
    %66 = vector.shape_cast %65 : vector<16xf32> to vector<16x1xf32>
    %67 = vector.broadcast %66 : vector<16x1xf32> to vector<16x16xf32>
    %68 = arith.subf %64, %67 : vector<16x16xf32>
    %69 = math.exp %68 : vector<16x16xf32>
    %cst_32 = arith.constant dense<0.000000e+00> : vector<16xf32>
    %70 = vector.multi_reduction <add>, %69, %cst_32 [1] : vector<16x16xf32> to vector<16xf32>
    %71 = vector.shape_cast %70 : vector<16xf32> to vector<16x1xf32>
    %cst_33 = arith.constant 9.99999968E-21 : f32
    %72 = vector.broadcast %cst_33 : f32 to vector<16x1xf32>
    %73 = arith.maximumf %71, %72 : vector<16x1xf32>
    %74 = tpu.reciprocal %73 {approx = true} : vector<16x1xf32> -> vector<16x1xf32>
    %75 = vector.broadcast %74 : vector<16x1xf32> to vector<16x16xf32>
    %76 = arith.mulf %69, %75 : vector<16x16xf32>
    %cst_34 = arith.constant dense<0.000000e+00> : vector<16x256xf32>
    %77 = tpu.matmul %76, %46, %cst_34 {dimension_numbers = #tpu.dot_dimension_numbers<[1], [0], [0], [1], [0, 0, 1, 1], [], []>} : vector<16x16xf32>, vector<16x256xf32>, vector<16x256xf32> -> vector<16x256xf32>
    %78 = vector.broadcast %44 : vector<1x256xf32> to vector<16x256xf32>
    %79 = arith.addf %77, %78 : vector<16x256xf32>
    %c0_35 = arith.constant 0 : index
    %c0_36 = arith.constant 0 : index
    %80 = vector.load %arg9[%c0_35, %c0_36] : memref<16x256xf32, #tpu.memory_space<vmem>>, vector<16x256xf32>
    tpu.vector_store %arg9[%c0_35, %c0_36], %79 {strides = array<i32>} : memref<16x256xf32, #tpu.memory_space<vmem>>, vector<16x256xf32>,
    return
  }
  func.func @transform_0(%arg0: i32) -> (i32, i32) {
    %c0_i32 = arith.constant 0 : i32
    %c0_i32_0 = arith.constant 0 : i32
    %c0_i32_1 = arith.constant 0 : i32
    return %c0_i32, %c0_i32_0 : i32, i32
  }
  func.func @transform_1(%arg0: i32) -> (i32, i32) {
    %c0_i32 = arith.constant 0 : i32
    %c0_i32_0 = arith.constant 0 : i32
    %c0_i32_1 = arith.constant 0 : i32
    return %c0_i32, %c0_i32_0 : i32, i32
  }
  func.func @transform_2(%arg0: i32) -> (i32, i32) {
    %c0_i32 = arith.constant 0 : i32
    %c0_i32_0 = arith.constant 0 : i32
    %c0_i32_1 = arith.constant 0 : i32
    return %c0_i32, %c0_i32_0 : i32, i32
  }
  func.func @transform_3(%arg0: i32) -> (i32, i32) {
    %c0_i32 = arith.constant 0 : i32
    %c0_i32_0 = arith.constant 0 : i32
    %c0_i32_1 = arith.constant 0 : i32
    return %c0_i32, %c0_i32_0 : i32, i32
  }
  func.func @transform_4(%arg0: i32) -> (i32, i32) {
    %c0_i32 = arith.constant 0 : i32
    %c0_i32_0 = arith.constant 0 : i32
    %c0_i32_1 = arith.constant 0 : i32
    return %c0_i32, %c0_i32_0 : i32, i32
  }
  func.func @transform_5(%arg0: i32) -> (i32, i32) {
    %c0_i32 = arith.constant 0 : i32
    %c0_i32_0 = arith.constant 0 : i32
    %c0_i32_1 = arith.constant 0 : i32
    return %c0_i32, %c0_i32_0 : i32, i32
  }
  func.func @transform_6(%arg0: i32) -> (i32, i32) {
    %c0_i32 = arith.constant 0 : i32
    %c0_i32_0 = arith.constant 0 : i32
    %c0_i32_1 = arith.constant 0 : i32
    return %c0_i32, %c0_i32_0 : i32, i32
  }
  func.func @transform_7(%arg0: i32) -> (i32, i32) {
    %c0_i32 = arith.constant 0 : i32
    %c0_i32_0 = arith.constant 0 : i32
    %c0_i32_1 = arith.constant 0 : i32
    return %c0_i32, %c0_i32_0 : i32, i32
  }
  func.func @transform_8(%arg0: i32) -> (i32, i32) {
    %c0_i32 = arith.constant 0 : i32
    %c0_i32_0 = arith.constant 0 : i32
    %c0_i32_1 = arith.constant 0 : i32
    return %c0_i32, %c0_i32_0 : i32, i32
  }
}

</mosaic_0001>

<llo_original>
// kernel: tpu_custom_call.1
$region0: #{tpu_custom_call.1}
  #allocation0 [shape = 'u32[]', space=smem, size = 0x4, offset = 0x4, fixed_abs, tag = 'smem constant byte address 0x4 - core index']
  #allocation1 [shape = 'u32[72,128]{1,0:T(1,128)}', space=vmem, size = 0x9000, scoped, tag = 'internal scratch']
  %s0 = inlined_call_operand.vmem [shape: f32[16,32], index: 0, kind: input, shape index: {}]
  %s1 = inlined_call_operand.vmem [shape: f32[16,16], index: 1, kind: input, shape index: {}]
  %s2 = inlined_call_operand.vmem [shape: f32[32,512], index: 2, kind: input, shape index: {}]
  %s3 = inlined_call_operand.vmem [shape: f32[256,1], index: 3, kind: input, shape index: {}]
  %s4 = inlined_call_operand.vmem [shape: f32[1,256], index: 4, kind: input, shape index: {}]
  %s5 = inlined_call_operand.hbm [shape: f32[256,512], index: 5, kind: input, shape index: {}]
  %s6 = inlined_call_operand.vmem [shape: f32[256,1], index: 6, kind: input, shape index: {}]
  %s7 = inlined_call_operand.vmem [shape: f32[1,256], index: 7, kind: input, shape index: {}]
  %s8 = inlined_call_operand.hbm [shape: f32[16,256], index: 8, kind: output, shape index: {}]
  %s9 = sld [smem:[#allocation0]]
  $region46: #{tpu_custom_call.1} parent=0
    _
  %s11 = ssub.s32 1, %s9
  %s12 = scalar_select 0, %s11, %s9
  $region1: #{tpu_custom_call.1} parent=0
    #allocation2 [shape = 'u8[524288]{0}', space=vmem, size = 0x80000, scoped, tag = 'input window, operand 5, single buffered']
    #allocation3 [shape = 's32[1]{0}', space=sflag, size = 0x4, scoped, tag = 'scoped memory for tpu_custom_call.1']
    #allocation4 [shape = 's32[1]{0}', space=sflag, size = 0x4, scoped, tag = 'scoped memory for tpu_custom_call.1']
    #allocation5 [shape = 'u8[16384]{0}', space=vmem, size = 0x4000, scoped, tag = 'output window, operand 0, single buffered']
    %13 = vsyncpa [#allocation3], 0
    %14 = vsyncpa [#allocation4], 0
    // Predicated region
    $region2: #{tpu_custom_call.1} parent=1 // pred_check
      _
    $region3: #{tpu_custom_call.1} parent=1 // pred_check_branch
      %16 = sbr.rel (0) target = $region5
    $region4: #{tpu_custom_call.1} parent=1 // pred_region
      _
    $region5: #{tpu_custom_call.1} parent=1 // pred_fallthru
      _
    // Predicated region
    $region6: #{tpu_custom_call.1} parent=1 // pred_check
      _
    $region7: #{tpu_custom_call.1} parent=1 // pred_check_branch
      %18 = sbr.rel (0) target = $region9
    $region8: #{tpu_custom_call.1} parent=1 // pred_region
      _
    $region9: #{tpu_custom_call.1} parent=1 // pred_fallthru
      _
    // Predicated region
    $region10: #{tpu_custom_call.1} parent=1 // pred_check
      _
    $region11: #{tpu_custom_call.1} parent=1 // pred_check_branch
      %20 = sbr.rel (0) target = $region13
    $region12: #{tpu_custom_call.1} parent=1 // pred_region
      _
    $region13: #{tpu_custom_call.1} parent=1 // pred_fallthru
      _
    // Predicated region
    $region14: #{tpu_custom_call.1} parent=1 // pred_check
      _
    $region15: #{tpu_custom_call.1} parent=1 // pred_check_branch
      %22 = sbr.rel (0) target = $region17
    $region16: #{tpu_custom_call.1} parent=1 // pred_region
      _
    $region17: #{tpu_custom_call.1} parent=1 // pred_fallthru
      _
    // Predicated region
    $region18: #{tpu_custom_call.1} parent=1 // pred_check
      _
    $region19: #{tpu_custom_call.1} parent=1 // pred_check_branch
      %24 = sbr.rel (0) target = $region21
    $region20: #{tpu_custom_call.1} parent=1 // pred_region
      _
    $region21: #{tpu_custom_call.1} parent=1 // pred_fallthru
      _
    // Predicated region
    $region22: #{tpu_custom_call.1} parent=1 // pred_check
      _
    $region23: #{tpu_custom_call.1} parent=1 // pred_check_branch
      %26 = sbr.rel (0) target = $region25
    $region24: #{tpu_custom_call.1} parent=1 // pred_region
      %28 = vsyncadd [#allocation3], 0
      %s29 = sshll.u32 %s5, 4
      %s30 = int_to_ptr.hbm [resolvable:$true] %s29
      %s31 = sshll.u32 [#allocation2], 4
      %s32 = int_to_ptr.vmem [resolvable:$true] %s31
      %37 = dma.hbm_to_vmem [thread:$0]  %s30, 16384, %s32, [#allocation3], 512, 512, 32
    $region25: #{tpu_custom_call.1} parent=1 // pred_fallthru
      _
    // Predicated region
    $region26: #{tpu_custom_call.1} parent=1 // pred_check
      _
    $region27: #{tpu_custom_call.1} parent=1 // pred_check_branch
      %39 = sbr.rel (0) target = $region29
    $region28: #{tpu_custom_call.1} parent=1 // pred_region
      _
    $region29: #{tpu_custom_call.1} parent=1 // pred_fallthru
      _
    // Predicated region
    $region30: #{tpu_custom_call.1} parent=1 // pred_check
      _
    $region31: #{tpu_custom_call.1} parent=1 // pred_check_branch
      %41 = sbr.rel (0) target = $region33
    $region32: #{tpu_custom_call.1} parent=1 // pred_region
      _
    $region33: #{tpu_custom_call.1} parent=1 // pred_fallthru
      _
    // Predicated region
    $region34: #{tpu_custom_call.1} parent=1 // pred_check
      _
    $region35: #{tpu_custom_call.1} parent=1 // pred_check_branch
      %43 = sbr.rel (0) target = $region37
    $region36: #{tpu_custom_call.1} parent=1 // pred_region
      %45 = dma.done [#allocation3], 16384
    $region37: #{tpu_custom_call.1} parent=1 // pred_fallthru
      _
    %v46 = vld [vmem:[%s0] sm:$0xff]
    %v47 = vld [vmem:[%s0 + $0x8] sm:$0xff]
    %v48 = vld [vmem:[%s1] sm:$0xff]
    %v49 = vld [vmem:[%s1 + $0x8] sm:$0xff]
    %v50 = vld [vmem:[%s2] sm:$0xff]
    %v51 = vld [vmem:[%s2 + $0x8] sm:$0xff]
    %v52 = vld [vmem:[%s2 + $0x10] sm:$0xff]
    %v53 = vld [vmem:[%s2 + $0x18] sm:$0xff]
    %v54 = vld [vmem:[%s2 + $0x20] sm:$0xff]
    %v55 = vld [vmem:[%s2 + $0x28] sm:$0xff]
    %v56 = vld [vmem:[%s2 + $0x30] sm:$0xff]
    %v57 = vld [vmem:[%s2 + $0x38] sm:$0xff]
    %v58 = vld [vmem:[%s2 + $0x40] sm:$0xff]
    %v59 = vld [vmem:[%s2 + $0x48] sm:$0xff]
    %v60 = vld [vmem:[%s2 + $0x50] sm:$0xff]
    %v61 = vld [vmem:[%s2 + $0x58] sm:$0xff]
    %v62 = vld [vmem:[%s2 + $0x60] sm:$0xff]
    %v63 = vld [vmem:[%s2 + $0x68] sm:$0xff]
    %v64 = vld [vmem:[%s2 + $0x70] sm:$0xff]
    %v65 = vld [vmem:[%s2 + $0x78] sm:$0xff]
    %v66 = vld [vmem:[%s3] sm:$0xff]
    %v67 = vld [vmem:[%s3 + $0x8] sm:$0xff]
    %v68 = vld [vmem:[%s3 + $0x10] sm:$0xff]
    %v69 = vld [vmem:[%s3 + $0x18] sm:$0xff]
    %v70 = vld [vmem:[%s3 + $0x20] sm:$0xff]
    %v71 = vld [vmem:[%s3 + $0x28] sm:$0xff]
    %v72 = vld [vmem:[%s3 + $0x30] sm:$0xff]
    %v73 = vld [vmem:[%s3 + $0x38] sm:$0xff]
    %v74 = vld [vmem:[%s3 + $0x40] sm:$0xff]
    %v75 = vld [vmem:[%s3 + $0x48] sm:$0xff]
    %v76 = vld [vmem:[%s3 + $0x50] sm:$0xff]
    %v77 = vld [vmem:[%s3 + $0x58] sm:$0xff]
    %v78 = vld [vmem:[%s3 + $0x60] sm:$0xff]
    %v79 = vld [vmem:[%s3 + $0x68] sm:$0xff]
    %v80 = vld [vmem:[%s3 + $0x70] sm:$0xff]
    %v81 = vld [vmem:[%s3 + $0x78] sm:$0xff]
    %v82 = vld [vmem:[%s3 + $0x80] sm:$0xff]
    %v83 = vld [vmem:[%s3 + $0x88] sm:$0xff]
    %v84 = vld [vmem:[%s3 + $0x90] sm:$0xff]
    %v85 = vld [vmem:[%s3 + $0x98] sm:$0xff]
    %v86 = vld [vmem:[%s3 + $0xa0] sm:$0xff]
    %v87 = vld [vmem:[%s3 + $0xa8] sm:$0xff]
    %v88 = vld [vmem:[%s3 + $0xb0] sm:$0xff]
    %v89 = vld [vmem:[%s3 + $0xb8] sm:$0xff]
    %v90 = vld [vmem:[%s3 + $0xc0] sm:$0xff]
    %v91 = vld [vmem:[%s3 + $0xc8] sm:$0xff]
    %v92 = vld [vmem:[%s3 + $0xd0] sm:$0xff]
    %v93 = vld [vmem:[%s3 + $0xd8] sm:$0xff]
    %v94 = vld [vmem:[%s3 + $0xe0] sm:$0xff]
    %v95 = vld [vmem:[%s3 + $0xe8] sm:$0xff]
    %v96 = vld [vmem:[%s3 + $0xf0] sm:$0xff]
    %v97 = vld [vmem:[%s3 + $0xf8] sm:$0xff]
    %v98 = vld [vmem:[%s4] sm:$0x3]
    %vm99 = vcmask 261120
    %v101 = vsel %vm99, %v46, 0
    %v104 = vsel %vm99, %v47, 0
    %106 = vmatpush.msra.mxu0 0.0
    %107 = vmatpush.msra.mxu0 0.0
    %108 = vmatpush.msra.mxu0 0.0
    %109 = vmatpush.msra.mxu0 0.0
    %110 = vmatpush.msra.mxu0 0.0
    %111 = vmatpush.msra.mxu0 0.0
    %112 = vmatpush.msra.mxu0 0.0
    %113 = vmatpush.msra.mxu0 0.0
    %114 = vmatpush.msra.mxu0 0.0
    %115 = vmatpush.msra.mxu0 0.0
    %116 = vmatpush.msra.mxu0 0.0
    %117 = vmatpush.msra.mxu0 0.0
    %118 = vmatpush.msra.mxu0 %v62
    %119 = vmatpush.msra.mxu0 %v58
    %120 = vmatpush.msra.mxu0 %v54
    %121 = vmatpush.msra.mxu0 %v50
    %122 = vmatmul.f32.gmra.mxu0 %v101
    %v123 = vpop.f32.mrf.mxu0
    %v124 = vadd.f32 0.0, %v123
    %125 = vmatmul.f32.gmra.mxu0 %v104
    %v126 = vpop.f32.mrf.mxu0
    %v127 = vadd.f32 0.0, %v126
    %128 = vdwg.mxu0
    %129 = vmatpush.msra.mxu0 0.0
    %130 = vmatpush.msra.mxu0 0.0
    %131 = vmatpush.msra.mxu0 0.0
    %132 = vmatpush.msra.mxu0 0.0
    %133 = vmatpush.msra.mxu0 0.0
    %134 = vmatpush.msra.mxu0 0.0
    %135 = vmatpush.msra.mxu0 0.0
    %136 = vmatpush.msra.mxu0 0.0
    %137 = vmatpush.msra.mxu0 0.0
    %138 = vmatpush.msra.mxu0 0.0
    %139 = vmatpush.msra.mxu0 0.0
    %140 = vmatpush.msra.mxu0 0.0
    %141 = vmatpush.msra.mxu0 %v63
    %142 = vmatpush.msra.mxu0 %v59
    %143 = vmatpush.msra.mxu0 %v55
    %144 = vmatpush.msra.mxu0 %v51
    %145 = vmatmul.f32.gmra.mxu0 %v101
    %v146 = vpop.f32.mrf.mxu0
    %v147 = vadd.f32 0.0, %v146
    %148 = vmatmul.f32.gmra.mxu0 %v104
    %v149 = vpop.f32.mrf.mxu0
    %v150 = vadd.f32 0.0, %v149
    %151 = vdwg.mxu0
    %152 = vmatpush.msra.mxu0 0.0
    %153 = vmatpush.msra.mxu0 0.0
    %154 = vmatpush.msra.mxu0 0.0
    %155 = vmatpush.msra.mxu0 0.0
    %156 = vmatpush.msra.mxu0 0.0
    %157 = vmatpush.msra.mxu0 0.0
    %158 = vmatpush.msra.mxu0 0.0
    %159 = vmatpush.msra.mxu0 0.0
    %160 = vmatpush.msra.mxu0 0.0
    %161 = vmatpush.msra.mxu0 0.0
    %162 = vmatpush.msra.mxu0 0.0
    %163 = vmatpush.msra.mxu0 0.0
    %164 = vmatpush.msra.mxu0 %v64
    %165 = vmatpush.msra.mxu0 %v60
    %166 = vmatpush.msra.mxu0 %v56
    %167 = vmatpush.msra.mxu0 %v52
    %168 = vmatmul.f32.gmra.mxu0 %v101
    %v169 = vpop.f32.mrf.mxu0
    %v170 = vadd.f32 0.0, %v169
    %171 = vmatmul.f32.gmra.mxu0 %v104
    %v172 = vpop.f32.mrf.mxu0
    %v173 = vadd.f32 0.0, %v172
    %174 = vdwg.mxu0
    %175 = vmatpush.msra.mxu0 0.0
    %176 = vmatpush.msra.mxu0 0.0
    %177 = vmatpush.msra.mxu0 0.0
    %178 = vmatpush.msra.mxu0 0.0
    %179 = vmatpush.msra.mxu0 0.0
    %180 = vmatpush.msra.mxu0 0.0
    %181 = vmatpush.msra.mxu0 0.0
    %182 = vmatpush.msra.mxu0 0.0
    %183 = vmatpush.msra.mxu0 0.0
    %184 = vmatpush.msra.mxu0 0.0
    %185 = vmatpush.msra.mxu0 0.0
    %186 = vmatpush.msra.mxu0 0.0
    %187 = vmatpush.msra.mxu0 %v65
    %188 = vmatpush.msra.mxu0 %v61
    %189 = vmatpush.msra.mxu0 %v57
    %190 = vmatpush.msra.mxu0 %v53
    %191 = vmatmul.f32.gmra.mxu0 %v101
    %v192 = vpop.f32.mrf.mxu0
    %v193 = vadd.f32 0.0, %v192
    %194 = vmatmul.f32.gmra.mxu0 %v104
    %v195 = vpop.f32.mrf.mxu0
    %v196 = vadd.f32 0.0, %v195
    %197 = vdwg.mxu0
    %v202 = vrot.slane %v193, 7
    %v203 = vrot.slane %v196, 7
    %vm204 = vcmask 1040384
    %v205 = vsel %vm204, %v170, %v202
    %vm206 = vcmask 1041409
    %v207 = vsel %vm206, %v170, %v202
    %v208 = vrot.slane %v207, 1
    %vm209 = vcmask 1042434
    %v210 = vsel %vm209, %v170, %v202
    %v211 = vrot.slane %v210, 2
    %vm212 = vcmask 1043459
    %v213 = vsel %vm212, %v170, %v202
    %v214 = vrot.slane %v213, 3
    %vm215 = vcmask 1044484
    %v216 = vsel %vm215, %v170, %v202
    %v217 = vrot.slane %v216, 4
    %vm218 = vcmask 1045509
    %v219 = vsel %vm218, %v170, %v202
    %v220 = vrot.slane %v219, 5
    %vm221 = vcmask 1046534
    %v222 = vsel %vm221, %v170, %v202
    %v223 = vrot.slane %v222, 6
    %vm224 = vcmask 1046528
    %v225 = vsel %vm224, %v202, %v170
    %v226 = vrot.slane %v225, 7
    %v227 = vsel %vm204, %v173, %v203
    %v228 = vsel %vm206, %v173, %v203
    %v229 = vrot.slane %v228, 1
    %v230 = vsel %vm209, %v173, %v203
    %v231 = vrot.slane %v230, 2
    %v232 = vsel %vm212, %v173, %v203
    %v233 = vrot.slane %v232, 3
    %v234 = vsel %vm215, %v173, %v203
    %v235 = vrot.slane %v234, 4
    %v236 = vsel %vm218, %v173, %v203
    %v237 = vrot.slane %v236, 5
    %v238 = vsel %vm221, %v173, %v203
    %v239 = vrot.slane %v238, 6
    %v240 = vsel %vm224, %v203, %v173
    %v241 = vrot.slane %v240, 7
    %v242 = vperm.slane %v205, 0
    %v243 = vperm.slane %v205, 1
    %v244 = vperm.slane %v208, 0
    %v245 = vperm.slane %v208, 1
    %v246 = vperm.slane %v211, 0
    %v247 = vperm.slane %v211, 1
    %v248 = vperm.slane %v214, 0
    %v249 = vperm.slane %v214, 1
    %v250 = vperm.slane %v217, 0
    %v251 = vperm.slane %v217, 1
    %v252 = vperm.slane %v220, 0
    %v253 = vperm.slane %v220, 1
    %v254 = vperm.slane %v223, 0
    %v255 = vperm.slane %v223, 1
    %v256 = vperm.slane %v226, 0
    %v257 = vperm.slane %v226, 1
    %v258 = vperm.slane %v227, 0
    %v259 = vperm.slane %v227, 1
    %v260 = vperm.slane %v229, 0
    %v261 = vperm.slane %v229, 1
    %v262 = vperm.slane %v231, 0
    %v263 = vperm.slane %v231, 1
    %v264 = vperm.slane %v233, 0
    %v265 = vperm.slane %v233, 1
    %v266 = vperm.slane %v235, 0
    %v267 = vperm.slane %v235, 1
    %v268 = vperm.slane %v237, 0
    %v269 = vperm.slane %v237, 1
    %v270 = vperm.slane %v239, 0
    %v271 = vperm.slane %v239, 1
    %v272 = vperm.slane %v241, 0
    %v273 = vperm.slane %v241, 1
    %v306 = vadd.f32 %v124, %v242
    %v307 = vadd.f32 %v147, %v243
    %v308 = vadd.f32 %v127, %v242
    %v309 = vadd.f32 %v150, %v243
    %v310 = vadd.f32 %v124, %v244
    %v311 = vadd.f32 %v147, %v245
    %v312 = vadd.f32 %v127, %v244
    %v313 = vadd.f32 %v150, %v245
    %v314 = vadd.f32 %v124, %v246
    %v315 = vadd.f32 %v147, %v247
    %v316 = vadd.f32 %v127, %v246
    %v317 = vadd.f32 %v150, %v247
    %v318 = vadd.f32 %v124, %v248
    %v319 = vadd.f32 %v147, %v249
    %v320 = vadd.f32 %v127, %v248
    %v321 = vadd.f32 %v150, %v249
    %v322 = vadd.f32 %v124, %v250
    %v323 = vadd.f32 %v147, %v251
    %v324 = vadd.f32 %v127, %v250
    %v325 = vadd.f32 %v150, %v251
    %v326 = vadd.f32 %v124, %v252
    %v327 = vadd.f32 %v147, %v253
    %v328 = vadd.f32 %v127, %v252
    %v329 = vadd.f32 %v150, %v253
    %v330 = vadd.f32 %v124, %v254
    %v331 = vadd.f32 %v147, %v255
    %v332 = vadd.f32 %v127, %v254
    %v333 = vadd.f32 %v150, %v255
    %v334 = vadd.f32 %v124, %v256
    %v335 = vadd.f32 %v147, %v257
    %v336 = vadd.f32 %v127, %v256
    %v337 = vadd.f32 %v150, %v257
    %v338 = vadd.f32 %v124, %v258
    %v339 = vadd.f32 %v147, %v259
    %v340 = vadd.f32 %v127, %v258
    %v341 = vadd.f32 %v150, %v259
    %v342 = vadd.f32 %v124, %v260
    %v343 = vadd.f32 %v147, %v261
    %v344 = vadd.f32 %v127, %v260
    %v345 = vadd.f32 %v150, %v261
    %v346 = vadd.f32 %v124, %v262
    %v347 = vadd.f32 %v147, %v263
    %v348 = vadd.f32 %v127, %v262
    %v349 = vadd.f32 %v150, %v263
    %v350 = vadd.f32 %v124, %v264
    %v351 = vadd.f32 %v147, %v265
    %v352 = vadd.f32 %v127, %v264
    %v353 = vadd.f32 %v150, %v265
    %v354 = vadd.f32 %v124, %v266
    %v355 = vadd.f32 %v147, %v267
    %v356 = vadd.f32 %v127, %v266
    %v357 = vadd.f32 %v150, %v267
    %v358 = vadd.f32 %v124, %v268
    %v359 = vadd.f32 %v147, %v269
    %v360 = vadd.f32 %v127, %v268
    %v361 = vadd.f32 %v150, %v269
    %v362 = vadd.f32 %v124, %v270
    %v363 = vadd.f32 %v147, %v271
    %v364 = vadd.f32 %v127, %v270
    %v365 = vadd.f32 %v150, %v271
    %v366 = vadd.f32 %v124, %v272
    %v367 = vadd.f32 %v147, %v273
    %v368 = vadd.f32 %v127, %v272
    %v369 = vadd.f32 %v150, %v273
    %vm370 = vcmp.gt.f32.partialorder %v306, 0.0
    %vm371 = vcmp.gt.f32.partialorder %v307, 0.0
    %vm372 = vcmp.gt.f32.partialorder %v308, 0.0
    %vm373 = vcmp.gt.f32.partialorder %v309, 0.0
    %vm374 = vcmp.gt.f32.partialorder %v310, 0.0
    %vm375 = vcmp.gt.f32.partialorder %v311, 0.0
    %vm376 = vcmp.gt.f32.partialorder %v312, 0.0
    %vm377 = vcmp.gt.f32.partialorder %v313, 0.0
    %vm378 = vcmp.gt.f32.partialorder %v314, 0.0
    %vm379 = vcmp.gt.f32.partialorder %v315, 0.0
    %vm380 = vcmp.gt.f32.partialorder %v316, 0.0
    %vm381 = vcmp.gt.f32.partialorder %v317, 0.0
    %vm382 = vcmp.gt.f32.partialorder %v318, 0.0
    %vm383 = vcmp.gt.f32.partialorder %v319, 0.0
    %vm384 = vcmp.gt.f32.partialorder %v320, 0.0
    %vm385 = vcmp.gt.f32.partialorder %v321, 0.0
    %vm386 = vcmp.gt.f32.partialorder %v322, 0.0
    %vm387 = vcmp.gt.f32.partialorder %v323, 0.0
    %vm388 = vcmp.gt.f32.partialorder %v324, 0.0
    %vm389 = vcmp.gt.f32.partialorder %v325, 0.0
    %vm390 = vcmp.gt.f32.partialorder %v326, 0.0
    %vm391 = vcmp.gt.f32.partialorder %v327, 0.0
    %vm392 = vcmp.gt.f32.partialorder %v328, 0.0
    %vm393 = vcmp.gt.f32.partialorder %v329, 0.0
    %vm394 = vcmp.gt.f32.partialorder %v330, 0.0
    %vm395 = vcmp.gt.f32.partialorder %v331, 0.0
    %vm396 = vcmp.gt.f32.partialorder %v332, 0.0
    %vm397 = vcmp.gt.f32.partialorder %v333, 0.0
    %vm398 = vcmp.gt.f32.partialorder %v334, 0.0
    %vm399 = vcmp.gt.f32.partialorder %v335, 0.0
    %vm400 = vcmp.gt.f32.partialorder %v336, 0.0
    %vm401 = vcmp.gt.f32.partialorder %v337, 0.0
    %vm402 = vcmp.gt.f32.partialorder %v338, 0.0
    %vm403 = vcmp.gt.f32.partialorder %v339, 0.0
    %vm404 = vcmp.gt.f32.partialorder %v340, 0.0
    %vm405 = vcmp.gt.f32.partialorder %v341, 0.0
    %vm406 = vcmp.gt.f32.partialorder %v342, 0.0
    %vm407 = vcmp.gt.f32.partialorder %v343, 0.0
    %vm408 = vcmp.gt.f32.partialorder %v344, 0.0
    %vm409 = vcmp.gt.f32.partialorder %v345, 0.0
    %vm410 = vcmp.gt.f32.partialorder %v346, 0.0
    %vm411 = vcmp.gt.f32.partialorder %v347, 0.0
    %vm412 = vcmp.gt.f32.partialorder %v348, 0.0
    %vm413 = vcmp.gt.f32.partialorder %v349, 0.0
    %vm414 = vcmp.gt.f32.partialorder %v350, 0.0
    %vm415 = vcmp.gt.f32.partialorder %v351, 0.0
    %vm416 = vcmp.gt.f32.partialorder %v352, 0.0
    %vm417 = vcmp.gt.f32.partialorder %v353, 0.0
    %vm418 = vcmp.gt.f32.partialorder %v354, 0.0
    %vm419 = vcmp.gt.f32.partialorder %v355, 0.0
    %vm420 = vcmp.gt.f32.partialorder %v356, 0.0
    %vm421 = vcmp.gt.f32.partialorder %v357, 0.0
    %vm422 = vcmp.gt.f32.partialorder %v358, 0.0
    %vm423 = vcmp.gt.f32.partialorder %v359, 0.0
    %vm424 = vcmp.gt.f32.partialorder %v360, 0.0
    %vm425 = vcmp.gt.f32.partialorder %v361, 0.0
    %vm426 = vcmp.gt.f32.partialorder %v362, 0.0
    %vm427 = vcmp.gt.f32.partialorder %v363, 0.0
    %vm428 = vcmp.gt.f32.partialorder %v364, 0.0
    %vm429 = vcmp.gt.f32.partialorder %v365, 0.0
    %vm430 = vcmp.gt.f32.partialorder %v366, 0.0
    %vm431 = vcmp.gt.f32.partialorder %v367, 0.0
    %vm432 = vcmp.gt.f32.partialorder %v368, 0.0
    %vm433 = vcmp.gt.f32.partialorder %v369, 0.0
    %v434 = vmul.f32 %v306, 0.2
    %v435 = vmul.f32 %v307, 0.2
    %v436 = vmul.f32 %v308, 0.2
    %v437 = vmul.f32 %v309, 0.2
    %v438 = vmul.f32 %v310, 0.2
    %v439 = vmul.f32 %v311, 0.2
    %v440 = vmul.f32 %v312, 0.2
    %v441 = vmul.f32 %v313, 0.2
    %v442 = vmul.f32 %v314, 0.2
    %v443 = vmul.f32 %v315, 0.2
    %v444 = vmul.f32 %v316, 0.2
    %v445 = vmul.f32 %v317, 0.2
    %v446 = vmul.f32 %v318, 0.2
    %v447 = vmul.f32 %v319, 0.2
    %v448 = vmul.f32 %v320, 0.2
    %v449 = vmul.f32 %v321, 0.2
    %v450 = vmul.f32 %v322, 0.2
    %v451 = vmul.f32 %v323, 0.2
    %v452 = vmul.f32 %v324, 0.2
    %v453 = vmul.f32 %v325, 0.2
    %v454 = vmul.f32 %v326, 0.2
    %v455 = vmul.f32 %v327, 0.2
    %v456 = vmul.f32 %v328, 0.2
    %v457 = vmul.f32 %v329, 0.2
    %v458 = vmul.f32 %v330, 0.2
    %v459 = vmul.f32 %v331, 0.2
    %v460 = vmul.f32 %v332, 0.2
    %v461 = vmul.f32 %v333, 0.2
    %v462 = vmul.f32 %v334, 0.2
    %v463 = vmul.f32 %v335, 0.2
    %v464 = vmul.f32 %v336, 0.2
    %v465 = vmul.f32 %v337, 0.2
    %v466 = vmul.f32 %v338, 0.2
    %v467 = vmul.f32 %v339, 0.2
    %v468 = vmul.f32 %v340, 0.2
    %v469 = vmul.f32 %v341, 0.2
    %v470 = vmul.f32 %v342, 0.2
    %v471 = vmul.f32 %v343, 0.2
    %v472 = vmul.f32 %v344, 0.2
    %v473 = vmul.f32 %v345, 0.2
    %v474 = vmul.f32 %v346, 0.2
    %v475 = vmul.f32 %v347, 0.2
    %v476 = vmul.f32 %v348, 0.2
    %v477 = vmul.f32 %v349, 0.2
    %v478 = vmul.f32 %v350, 0.2
    %v479 = vmul.f32 %v351, 0.2
    %v480 = vmul.f32 %v352, 0.2
    %v481 = vmul.f32 %v353, 0.2
    %v482 = vmul.f32 %v354, 0.2
    %v483 = vmul.f32 %v355, 0.2
    %v484 = vmul.f32 %v356, 0.2
    %v485 = vmul.f32 %v357, 0.2
    %v486 = vmul.f32 %v358, 0.2
    %v487 = vmul.f32 %v359, 0.2
    %v488 = vmul.f32 %v360, 0.2
    %v489 = vmul.f32 %v361, 0.2
    %v490 = vmul.f32 %v362, 0.2
    %v491 = vmul.f32 %v363, 0.2
    %v492 = vmul.f32 %v364, 0.2
    %v493 = vmul.f32 %v365, 0.2
    %v494 = vmul.f32 %v366, 0.2
    %v495 = vmul.f32 %v367, 0.2
    %v496 = vmul.f32 %v368, 0.2
    %v497 = vmul.f32 %v369, 0.2
    %v498 = vsel %vm370, %v306, %v434
    %v499 = vsel %vm371, %v307, %v435
    %v500 = vsel %vm372, %v308, %v436
    %v501 = vsel %vm373, %v309, %v437
    %v502 = vsel %vm374, %v310, %v438
    %v503 = vsel %vm375, %v311, %v439
    %v504 = vsel %vm376, %v312, %v440
    %v505 = vsel %vm377, %v313, %v441
    %v506 = vsel %vm378, %v314, %v442
    %v507 = vsel %vm379, %v315, %v443
    %v508 = vsel %vm380, %v316, %v444
    %v509 = vsel %vm381, %v317, %v445
    %v510 = vsel %vm382, %v318, %v446
    %v511 = vsel %vm383, %v319, %v447
    %v512 = vsel %vm384, %v320, %v448
    %v513 = vsel %vm385, %v321, %v449
    %v514 = vsel %vm386, %v322, %v450
    %v515 = vsel %vm387, %v323, %v451
    %v516 = vsel %vm388, %v324, %v452
    %v517 = vsel %vm389, %v325, %v453
    %v518 = vsel %vm390, %v326, %v454
    %v519 = vsel %vm391, %v327, %v455
    %v520 = vsel %vm392, %v328, %v456
    %v521 = vsel %vm393, %v329, %v457
    %v522 = vsel %vm394, %v330, %v458
    %v523 = vsel %vm395, %v331, %v459
    %v524 = vsel %vm396, %v332, %v460
    %v525 = vsel %vm397, %v333, %v461
    %v526 = vsel %vm398, %v334, %v462
    %v527 = vsel %vm399, %v335, %v463
    %v528 = vsel %vm400, %v336, %v464
    %v529 = vsel %vm401, %v337, %v465
    %v530 = vsel %vm402, %v338, %v466
    %v531 = vsel %vm403, %v339, %v467
    %v532 = vsel %vm404, %v340, %v468
    %v533 = vsel %vm405, %v341, %v469
    %v534 = vsel %vm406, %v342, %v470
    %v535 = vsel %vm407, %v343, %v471
    %v536 = vsel %vm408, %v344, %v472
    %v537 = vsel %vm409, %v345, %v473
    %v538 = vsel %vm410, %v346, %v474
    %v539 = vsel %vm411, %v347, %v475
    %v540 = vsel %vm412, %v348, %v476
    %v541 = vsel %vm413, %v349, %v477
    %v542 = vsel %vm414, %v350, %v478
    %v543 = vsel %vm415, %v351, %v479
    %v544 = vsel %vm416, %v352, %v480
    %v545 = vsel %vm417, %v353, %v481
    %v546 = vsel %vm418, %v354, %v482
    %v547 = vsel %vm419, %v355, %v483
    %v548 = vsel %vm420, %v356, %v484
    %v549 = vsel %vm421, %v357, %v485
    %v550 = vsel %vm422, %v358, %v486
    %v551 = vsel %vm423, %v359, %v487
    %v552 = vsel %vm424, %v360, %v488
    %v553 = vsel %vm425, %v361, %v489
    %v554 = vsel %vm426, %v362, %v490
    %v555 = vsel %vm427, %v363, %v491
    %v556 = vsel %vm428, %v364, %v492
    %v557 = vsel %vm429, %v365, %v493
    %v558 = vsel %vm430, %v366, %v494
    %v559 = vsel %vm431, %v367, %v495
    %v560 = vsel %vm432, %v368, %v496
    %v561 = vsel %vm433, %v369, %v497
    %562 = vmatpush.msra.mxu0 %v81
    %563 = vmatpush.msra.mxu0 %v80
    %564 = vmatpush.msra.mxu0 %v79
    %565 = vmatpush.msra.mxu0 %v78
    %566 = vmatpush.msra.mxu0 %v77
    %567 = vmatpush.msra.mxu0 %v76
    %568 = vmatpush.msra.mxu0 %v75
    %569 = vmatpush.msra.mxu0 %v74
    %570 = vmatpush.msra.mxu0 %v73
    %571 = vmatpush.msra.mxu0 %v72
    %572 = vmatpush.msra.mxu0 %v71
    %573 = vmatpush.msra.mxu0 %v70
    %574 = vmatpush.msra.mxu0 %v69
    %575 = vmatpush.msra.mxu0 %v68
    %576 = vmatpush.msra.mxu0 %v67
    %577 = vmatpush.msra.mxu0 %v66
    %578 = vmatmul.f32.gmra.mxu0 %v498
    %v579 = vpop.f32.mrf.mxu0
    %v580 = vadd.f32 0.0, %v579
    %581 = vmatmul.f32.gmra.mxu0 %v500
    %v582 = vpop.f32.mrf.mxu0
    %v583 = vadd.f32 0.0, %v582
    %584 = vmatmul.f32.gmra.mxu0 %v502
    %v585 = vpop.f32.mrf.mxu0
    %v586 = vadd.f32 0.0, %v585
    %587 = vmatmul.f32.gmra.mxu0 %v504
    %v588 = vpop.f32.mrf.mxu0
    %v589 = vadd.f32 0.0, %v588
    %590 = vmatmul.f32.gmra.mxu0 %v506
    %v591 = vpop.f32.mrf.mxu0
    %v592 = vadd.f32 0.0, %v591
    %593 = vmatmul.f32.gmra.mxu0 %v508
    %v594 = vpop.f32.mrf.mxu0
    %v595 = vadd.f32 0.0, %v594
    %596 = vmatmul.f32.gmra.mxu0 %v510
    %v597 = vpop.f32.mrf.mxu0
    %v598 = vadd.f32 0.0, %v597
    %599 = vmatmul.f32.gmra.mxu0 %v512
    %v600 = vpop.f32.mrf.mxu0
    %v601 = vadd.f32 0.0, %v600
    %602 = vmatmul.f32.gmra.mxu0 %v514
    %v603 = vpop.f32.mrf.mxu0
    %v604 = vadd.f32 0.0, %v603
    %605 = vmatmul.f32.gmra.mxu0 %v516
    %v606 = vpop.f32.mrf.mxu0
    %v607 = vadd.f32 0.0, %v606
    %608 = vmatmul.f32.gmra.mxu0 %v518
    %v609 = vpop.f32.mrf.mxu0
    %v610 = vadd.f32 0.0, %v609
    %611 = vmatmul.f32.gmra.mxu0 %v520
    %v612 = vpop.f32.mrf.mxu0
    %v613 = vadd.f32 0.0, %v612
    %614 = vmatmul.f32.gmra.mxu0 %v522
    %v615 = vpop.f32.mrf.mxu0
    %v616 = vadd.f32 0.0, %v615
    %617 = vmatmul.f32.gmra.mxu0 %v524
    %v618 = vpop.f32.mrf.mxu0
    %v619 = vadd.f32 0.0, %v618
    %620 = vmatmul.f32.gmra.mxu0 %v526
    %v621 = vpop.f32.mrf.mxu0
    %v622 = vadd.f32 0.0, %v621
    %623 = vmatmul.f32.gmra.mxu0 %v528
    %v624 = vpop.f32.mrf.mxu0
    %v625 = vadd.f32 0.0, %v624
    %626 = vmatmul.f32.gmra.mxu0 %v530
    %v627 = vpop.f32.mrf.mxu0
    %v628 = vadd.f32 0.0, %v627
    %629 = vmatmul.f32.gmra.mxu0 %v532
    %v630 = vpop.f32.mrf.mxu0
    %v631 = vadd.f32 0.0, %v630
    %632 = vmatmul.f32.gmra.mxu0 %v534
    %v633 = vpop.f32.mrf.mxu0
    %v634 = vadd.f32 0.0, %v633
    %635 = vmatmul.f32.gmra.mxu0 %v536
    %v636 = vpop.f32.mrf.mxu0
    %v637 = vadd.f32 0.0, %v636
    %638 = vmatmul.f32.gmra.mxu0 %v538
    %v639 = vpop.f32.mrf.mxu0
    %v640 = vadd.f32 0.0, %v639
    %641 = vmatmul.f32.gmra.mxu0 %v540
    %v642 = vpop.f32.mrf.mxu0
    %v643 = vadd.f32 0.0, %v642
    %644 = vmatmul.f32.gmra.mxu0 %v542
    %v645 = vpop.f32.mrf.mxu0
    %v646 = vadd.f32 0.0, %v645
    %647 = vmatmul.f32.gmra.mxu0 %v544
    %v648 = vpop.f32.mrf.mxu0
    %v649 = vadd.f32 0.0, %v648
    %650 = vmatmul.f32.gmra.mxu0 %v546
    %v651 = vpop.f32.mrf.mxu0
    %v652 = vadd.f32 0.0, %v651
    %653 = vmatmul.f32.gmra.mxu0 %v548
    %v654 = vpop.f32.mrf.mxu0
    %v655 = vadd.f32 0.0, %v654
    %656 = vmatmul.f32.gmra.mxu0 %v550
    %v657 = vpop.f32.mrf.mxu0
    %v658 = vadd.f32 0.0, %v657
    %659 = vmatmul.f32.gmra.mxu0 %v552
    %v660 = vpop.f32.mrf.mxu0
    %v661 = vadd.f32 0.0, %v660
    %662 = vmatmul.f32.gmra.mxu0 %v554
    %v663 = vpop.f32.mrf.mxu0
    %v664 = vadd.f32 0.0, %v663
    %665 = vmatmul.f32.gmra.mxu0 %v556
    %v666 = vpop.f32.mrf.mxu0
    %v667 = vadd.f32 0.0, %v666
    %668 = vmatmul.f32.gmra.mxu0 %v558
    %v669 = vpop.f32.mrf.mxu0
    %v670 = vadd.f32 0.0, %v669
    %671 = vmatmul.f32.gmra.mxu0 %v560
    %v672 = vpop.f32.mrf.mxu0
    %v673 = vadd.f32 0.0, %v672
    %674 = vdwg.mxu0
    %675 = vmatpush.msra.mxu0 %v97
    %676 = vmatpush.msra.mxu0 %v96
    %677 = vmatpush.msra.mxu0 %v95
    %678 = vmatpush.msra.mxu0 %v94
    %679 = vmatpush.msra.mxu0 %v93
    %680 = vmatpush.msra.mxu0 %v92
    %681 = vmatpush.msra.mxu0 %v91
    %682 = vmatpush.msra.mxu0 %v90
    %683 = vmatpush.msra.mxu0 %v89
    %684 = vmatpush.msra.mxu0 %v88
    %685 = vmatpush.msra.mxu0 %v87
    %686 = vmatpush.msra.mxu0 %v86
    %687 = vmatpush.msra.mxu0 %v85
    %688 = vmatpush.msra.mxu0 %v84
    %689 = vmatpush.msra.mxu0 %v83
    %690 = vmatpush.msra.mxu0 %v82
    %691 = vmatmul.f32.gmra.mxu0 %v499
    %v692 = vpop.f32.mrf.mxu0
    %v693 = vadd.f32 %v580, %v692
    %694 = vmatmul.f32.gmra.mxu0 %v501
    %v695 = vpop.f32.mrf.mxu0
    %v696 = vadd.f32 %v583, %v695
    %697 = vmatmul.f32.gmra.mxu0 %v503
    %v698 = vpop.f32.mrf.mxu0
    %v699 = vadd.f32 %v586, %v698
    %700 = vmatmul.f32.gmra.mxu0 %v505
    %v701 = vpop.f32.mrf.mxu0
    %v702 = vadd.f32 %v589, %v701
    %703 = vmatmul.f32.gmra.mxu0 %v507
    %v704 = vpop.f32.mrf.mxu0
    %v705 = vadd.f32 %v592, %v704
    %706 = vmatmul.f32.gmra.mxu0 %v509
    %v707 = vpop.f32.mrf.mxu0
    %v708 = vadd.f32 %v595, %v707
    %709 = vmatmul.f32.gmra.mxu0 %v511
    %v710 = vpop.f32.mrf.mxu0
    %v711 = vadd.f32 %v598, %v710
    %712 = vmatmul.f32.gmra.mxu0 %v513
    %v713 = vpop.f32.mrf.mxu0
    %v714 = vadd.f32 %v601, %v713
    %715 = vmatmul.f32.gmra.mxu0 %v515
    %v716 = vpop.f32.mrf.mxu0
    %v717 = vadd.f32 %v604, %v716
    %718 = vmatmul.f32.gmra.mxu0 %v517
    %v719 = vpop.f32.mrf.mxu0
    %v720 = vadd.f32 %v607, %v719
    %721 = vmatmul.f32.gmra.mxu0 %v519
    %v722 = vpop.f32.mrf.mxu0
    %v723 = vadd.f32 %v610, %v722
    %724 = vmatmul.f32.gmra.mxu0 %v521
    %v725 = vpop.f32.mrf.mxu0
    %v726 = vadd.f32 %v613, %v725
    %727 = vmatmul.f32.gmra.mxu0 %v523
    %v728 = vpop.f32.mrf.mxu0
    %v729 = vadd.f32 %v616, %v728
    %730 = vmatmul.f32.gmra.mxu0 %v525
    %v731 = vpop.f32.mrf.mxu0
    %v732 = vadd.f32 %v619, %v731
    %733 = vmatmul.f32.gmra.mxu0 %v527
    %v734 = vpop.f32.mrf.mxu0
    %v735 = vadd.f32 %v622, %v734
    %736 = vmatmul.f32.gmra.mxu0 %v529
    %v737 = vpop.f32.mrf.mxu0
    %v738 = vadd.f32 %v625, %v737
    %739 = vmatmul.f32.gmra.mxu0 %v531
    %v740 = vpop.f32.mrf.mxu0
    %v741 = vadd.f32 %v628, %v740
    %742 = vmatmul.f32.gmra.mxu0 %v533
    %v743 = vpop.f32.mrf.mxu0
    %v744 = vadd.f32 %v631, %v743
    %745 = vmatmul.f32.gmra.mxu0 %v535
    %v746 = vpop.f32.mrf.mxu0
    %v747 = vadd.f32 %v634, %v746
    %748 = vmatmul.f32.gmra.mxu0 %v537
    %v749 = vpop.f32.mrf.mxu0
    %v750 = vadd.f32 %v637, %v749
    %751 = vmatmul.f32.gmra.mxu0 %v539
    %v752 = vpop.f32.mrf.mxu0
    %v753 = vadd.f32 %v640, %v752
    %754 = vmatmul.f32.gmra.mxu0 %v541
    %v755 = vpop.f32.mrf.mxu0
    %v756 = vadd.f32 %v643, %v755
    %757 = vmatmul.f32.gmra.mxu0 %v543
    %v758 = vpop.f32.mrf.mxu0
    %v759 = vadd.f32 %v646, %v758
    %760 = vmatmul.f32.gmra.mxu0 %v545
    %v761 = vpop.f32.mrf.mxu0
    %v762 = vadd.f32 %v649, %v761
    %763 = vmatmul.f32.gmra.mxu0 %v547
    %v764 = vpop.f32.mrf.mxu0
    %v765 = vadd.f32 %v652, %v764
    %766 = vmatmul.f32.gmra.mxu0 %v549
    %v767 = vpop.f32.mrf.mxu0
    %v768 = vadd.f32 %v655, %v767
    %769 = vmatmul.f32.gmra.mxu0 %v551
    %v770 = vpop.f32.mrf.mxu0
    %v771 = vadd.f32 %v658, %v770
    %772 = vmatmul.f32.gmra.mxu0 %v553
    %v773 = vpop.f32.mrf.mxu0
    %v774 = vadd.f32 %v661, %v773
    %775 = vmatmul.f32.gmra.mxu0 %v555
    %v776 = vpop.f32.mrf.mxu0
    %v777 = vadd.f32 %v664, %v776
    %778 = vmatmul.f32.gmra.mxu0 %v557
    %v779 = vpop.f32.mrf.mxu0
    %v780 = vadd.f32 %v667, %v779
    %781 = vmatmul.f32.gmra.mxu0 %v559
    %v782 = vpop.f32.mrf.mxu0
    %v783 = vadd.f32 %v670, %v782
    %784 = vmatmul.f32.gmra.mxu0 %v561
    %v785 = vpop.f32.mrf.mxu0
    %v786 = vadd.f32 %v673, %v785
    %787 = vdwg.mxu0
    %vm788 = vcmp.gt.f32.partialorder %v48, 0.0
    %vm789 = vcmp.gt.f32.partialorder %v49, 0.0
    %822 = vset.pattern.permute.xlu0 0
    %823 = vperm.xlu0 %822, %v693
    %v824 = vpop.permute.xlu0 %823
    %825 = vset.pattern.permute.xlu0 0
    %826 = vperm.xlu0 %825, %v696
    %v827 = vpop.permute.xlu0 %826
    %828 = vset.pattern.permute.xlu0 0
    %829 = vperm.xlu0 %828, %v699
    %v830 = vpop.permute.xlu0 %829
    %831 = vset.pattern.permute.xlu0 0
    %832 = vperm.xlu0 %831, %v702
    %v833 = vpop.permute.xlu0 %832
    %834 = vset.pattern.permute.xlu0 0
    %835 = vperm.xlu0 %834, %v705
    %v836 = vpop.permute.xlu0 %835
    %837 = vset.pattern.permute.xlu0 0
    %838 = vperm.xlu0 %837, %v708
    %v839 = vpop.permute.xlu0 %838
    %840 = vset.pattern.permute.xlu0 0
    %841 = vperm.xlu0 %840, %v711
    %v842 = vpop.permute.xlu0 %841
    %843 = vset.pattern.permute.xlu0 0
    %844 = vperm.xlu0 %843, %v714
    %v845 = vpop.permute.xlu0 %844
    %846 = vset.pattern.permute.xlu0 0
    %847 = vperm.xlu0 %846, %v717
    %v848 = vpop.permute.xlu0 %847
    %849 = vset.pattern.permute.xlu0 0
    %850 = vperm.xlu0 %849, %v720
    %v851 = vpop.permute.xlu0 %850
    %852 = vset.pattern.permute.xlu0 0
    %853 = vperm.xlu0 %852, %v723
    %v854 = vpop.permute.xlu0 %853
    %855 = vset.pattern.permute.xlu0 0
    %856 = vperm.xlu0 %855, %v726
    %v857 = vpop.permute.xlu0 %856
    %858 = vset.pattern.permute.xlu0 0
    %859 = vperm.xlu0 %858, %v729
    %v860 = vpop.permute.xlu0 %859
    %861 = vset.pattern.permute.xlu0 0
    %862 = vperm.xlu0 %861, %v732
    %v863 = vpop.permute.xlu0 %862
    %864 = vset.pattern.permute.xlu0 0
    %865 = vperm.xlu0 %864, %v735
    %v866 = vpop.permute.xlu0 %865
    %867 = vset.pattern.permute.xlu0 0
    %868 = vperm.xlu0 %867, %v738
    %v869 = vpop.permute.xlu0 %868
    %870 = vset.pattern.permute.xlu0 0
    %871 = vperm.xlu0 %870, %v741
    %v872 = vpop.permute.xlu0 %871
    %873 = vset.pattern.permute.xlu0 0
    %874 = vperm.xlu0 %873, %v744
    %v875 = vpop.permute.xlu0 %874
    %876 = vset.pattern.permute.xlu0 0
    %877 = vperm.xlu0 %876, %v747
    %v878 = vpop.permute.xlu0 %877
    %879 = vset.pattern.permute.xlu0 0
    %880 = vperm.xlu0 %879, %v750
    %v881 = vpop.permute.xlu0 %880
    %882 = vset.pattern.permute.xlu0 0
    %883 = vperm.xlu0 %882, %v753
    %v884 = vpop.permute.xlu0 %883
    %885 = vset.pattern.permute.xlu0 0
    %886 = vperm.xlu0 %885, %v756
    %v887 = vpop.permute.xlu0 %886
    %888 = vset.pattern.permute.xlu0 0
    %889 = vperm.xlu0 %888, %v759
    %v890 = vpop.permute.xlu0 %889
    %891 = vset.pattern.permute.xlu0 0
    %892 = vperm.xlu0 %891, %v762
    %v893 = vpop.permute.xlu0 %892
    %894 = vset.pattern.permute.xlu0 0
    %895 = vperm.xlu0 %894, %v765
    %v896 = vpop.permute.xlu0 %895
    %897 = vset.pattern.permute.xlu0 0
    %898 = vperm.xlu0 %897, %v768
    %v899 = vpop.permute.xlu0 %898
    %900 = vset.pattern.permute.xlu0 0
    %901 = vperm.xlu0 %900, %v771
    %v902 = vpop.permute.xlu0 %901
    %903 = vset.pattern.permute.xlu0 0
    %904 = vperm.xlu0 %903, %v774
    %v905 = vpop.permute.xlu0 %904
    %906 = vset.pattern.permute.xlu0 0
    %907 = vperm.xlu0 %906, %v777
    %v908 = vpop.permute.xlu0 %907
    %909 = vset.pattern.permute.xlu0 0
    %910 = vperm.xlu0 %909, %v780
    %v911 = vpop.permute.xlu0 %910
    %912 = vset.pattern.permute.xlu0 0
    %913 = vperm.xlu0 %912, %v783
    %v914 = vpop.permute.xlu0 %913
    %915 = vset.pattern.permute.xlu0 0
    %916 = vperm.xlu0 %915, %v786
    %v917 = vpop.permute.xlu0 %916
    %v918 = vlaneseq
    %v919 = vand.u32 %v918, 127
    %v920 = vperm.slane %v824, %v919
    %v921 = vadd.s32 %v919, 4294967288
    %v922 = vperm.slane %v827, %v921
    %vm923 = vcmask 130112
    %v924 = vsel %vm923, %v922, %v920
    %v925 = vperm.slane %v830, %v919
    %v926 = vperm.slane %v833, %v921
    %v927 = vsel %vm923, %v926, %v925
    %v928 = vperm.slane %v836, %v919
    %v929 = vperm.slane %v839, %v921
    %v930 = vsel %vm923, %v929, %v928
    %v931 = vperm.slane %v842, %v919
    %v932 = vperm.slane %v845, %v921
    %v933 = vsel %vm923, %v932, %v931
    %v934 = vperm.slane %v848, %v919
    %v935 = vperm.slane %v851, %v921
    %v936 = vsel %vm923, %v935, %v934
    %v937 = vperm.slane %v854, %v919
    %v938 = vperm.slane %v857, %v921
    %v939 = vsel %vm923, %v938, %v937
    %v940 = vperm.slane %v860, %v919
    %v941 = vperm.slane %v863, %v921
    %v942 = vsel %vm923, %v941, %v940
    %v943 = vperm.slane %v866, %v919
    %v944 = vperm.slane %v869, %v921
    %v945 = vsel %vm923, %v944, %v943
    %v946 = vperm.slane %v872, %v919
    %v947 = vperm.slane %v875, %v921
    %v948 = vsel %vm923, %v947, %v946
    %v949 = vperm.slane %v878, %v919
    %v950 = vperm.slane %v881, %v921
    %v951 = vsel %vm923, %v950, %v949
    %v952 = vperm.slane %v884, %v919
    %v953 = vperm.slane %v887, %v921
    %v954 = vsel %vm923, %v953, %v952
    %v955 = vperm.slane %v890, %v919
    %v956 = vperm.slane %v893, %v921
    %v957 = vsel %vm923, %v956, %v955
    %v958 = vperm.slane %v896, %v919
    %v959 = vperm.slane %v899, %v921
    %v960 = vsel %vm923, %v959, %v958
    %v961 = vperm.slane %v902, %v919
    %v962 = vperm.slane %v905, %v921
    %v963 = vsel %vm923, %v962, %v961
    %v964 = vperm.slane %v908, %v919
    %v965 = vperm.slane %v911, %v921
    %v966 = vsel %vm923, %v965, %v964
    %v967 = vperm.slane %v914, %v919
    %v968 = vperm.slane %v917, %v921
    %v969 = vsel %vm923, %v968, %v967
    %v970 = vsel %vm206, %v927, %v924
    %v971 = vsel %vm209, %v930, %v970
    %v972 = vsel %vm212, %v933, %v971
    %v973 = vsel %vm215, %v936, %v972
    %v974 = vsel %vm218, %v939, %v973
    %v975 = vsel %vm221, %v942, %v974
    %vm976 = vcmask 1047559
    %v977 = vsel %vm976, %v945, %v975
    %v978 = vsel %vm206, %v951, %v948
    %v979 = vsel %vm209, %v954, %v978
    %v980 = vsel %vm212, %v957, %v979
    %v981 = vsel %vm215, %v960, %v980
    %v982 = vsel %vm218, %v963, %v981
    %v983 = vsel %vm221, %v966, %v982
    %v984 = vsel %vm976, %v969, %v983
    %v987 = vsel %vm788, %v977, -1e+30
    %v988 = vsel %vm789, %v984, -1e+30
    %vm989 = vcmask 130048
    %v990 = vsel %vm989, %v987, -inf
    %991 = vmax.xlane.f32.xlu0 %v990
    %v992 = vpop.xlane.xlu0 %991
    %v993 = vsel %vm989, %v988, -inf
    %994 = vmax.xlane.f32.xlu0 %v993
    %v995 = vpop.xlane.xlu0 %994
    %v996 = vsub.f32 %v987, %v992
    %v997 = vsub.f32 %v988, %v995
    %v998 = vmul.f32 %v996, 1.442695
    %v999 = vpow.pop %v998
    %v1000 = vmul.f32 %v997, 1.442695
    %v1001 = vpow.pop %v1000
    %v1002 = vsel %vm989, %v999, 0.0
    %1003 = vadd.xlane.f32.xlu0 %v1002
    %v1004 = vpop.xlane.xlu0 %1003
    %v1005 = vsel %vm989, %v1001, 0.0
    %1006 = vadd.xlane.f32.xlu0 %v1005
    %v1007 = vpop.xlane.xlu0 %1006
    %v1008 = vmax.f32 %v1004, 1e-20
    %v1009 = vmax.f32 %v1007, 1e-20
    %v1010 = vrcp.pop %v1008
    %v1011 = vrcp.pop %v1009
    %v1012 = vmul.f32 %v999, %v1010
    %v1013 = vmul.f32 %v1001, %v1011
    %v1015 = vperm.slane %v98, 0
    %v1016 = vperm.slane %v98, 1
    %v1020 = vsel %vm989, %v1012, 0
    %v1023 = vsel %vm989, %v1013, 0
    %1025 = vmatpush.msra.mxu0 0.0
    %1026 = vmatpush.msra.mxu0 0.0
    %1027 = vmatpush.msra.mxu0 0.0
    %1028 = vmatpush.msra.mxu0 0.0
    %1029 = vmatpush.msra.mxu0 0.0
    %1030 = vmatpush.msra.mxu0 0.0
    %1031 = vmatpush.msra.mxu0 0.0
    %1032 = vmatpush.msra.mxu0 0.0
    %1033 = vmatpush.msra.mxu0 0.0
    %1034 = vmatpush.msra.mxu0 0.0
    %1035 = vmatpush.msra.mxu0 0.0
    %1036 = vmatpush.msra.mxu0 0.0
    %1037 = vmatpush.msra.mxu0 0.0
    %1038 = vmatpush.msra.mxu0 0.0
    %1039 = vmatpush.msra.mxu0 %v127
    %1040 = vmatpush.msra.mxu0 %v124
    %1041 = vmatmul.f32.gmra.mxu0 %v1020
    %v1042 = vpop.f32.mrf.mxu0
    %v1043 = vadd.f32 %v1015, %v1042
    %1044 = vmatmul.f32.gmra.mxu0 %v1023
    %v1045 = vpop.f32.mrf.mxu0
    %v1046 = vadd.f32 %v1015, %v1045
    %1047 = vdwg.mxu0
    %1048 = vmatpush.msra.mxu0 0.0
    %1049 = vmatpush.msra.mxu0 0.0
    %1050 = vmatpush.msra.mxu0 0.0
    %1051 = vmatpush.msra.mxu0 0.0
    %1052 = vmatpush.msra.mxu0 0.0
    %1053 = vmatpush.msra.mxu0 0.0
    %1054 = vmatpush.msra.mxu0 0.0
    %1055 = vmatpush.msra.mxu0 0.0
    %1056 = vmatpush.msra.mxu0 0.0
    %1057 = vmatpush.msra.mxu0 0.0
    %1058 = vmatpush.msra.mxu0 0.0
    %1059 = vmatpush.msra.mxu0 0.0
    %1060 = vmatpush.msra.mxu0 0.0
    %1061 = vmatpush.msra.mxu0 0.0
    %1062 = vmatpush.msra.mxu0 %v150
    %1063 = vmatpush.msra.mxu0 %v147
    %1064 = vmatmul.f32.gmra.mxu0 %v1020
    %v1065 = vpop.f32.mrf.mxu0
    %v1066 = vadd.f32 %v1016, %v1065
    %1067 = vmatmul.f32.gmra.mxu0 %v1023
    %v1068 = vpop.f32.mrf.mxu0
    %v1069 = vadd.f32 %v1016, %v1068
    %1070 = vdwg.mxu0
    %v1071 = vmax.f32 %v1043, 0.0
    %v1072 = vmax.f32 %v1066, 0.0
    %v1073 = vmax.f32 %v1046, 0.0
    %v1074 = vmax.f32 %v1069, 0.0
    %v1075 = vld [vmem:[#allocation2] sm:$0xff]
    %v1076 = vld [vmem:[#allocation2 + $0x8] sm:$0xff]
    %v1077 = vld [vmem:[#allocation2 + $0x10] sm:$0xff]
    %v1078 = vld [vmem:[#allocation2 + $0x18] sm:$0xff]
    %v1079 = vld [vmem:[#allocation2 + $0x20] sm:$0xff]
    %v1080 = vld [vmem:[#allocation2 + $0x28] sm:$0xff]
    %v1081 = vld [vmem:[#allocation2 + $0x30] sm:$0xff]
    %v1082 = vld [vmem:[#allocation2 + $0x38] sm:$0xff]
    %v1083 = vld [vmem:[#allocation2 + $0x40] sm:$0xff]
    %v1084 = vld [vmem:[#allocation2 + $0x48] sm:$0xff]
    %v1085 = vld [vmem:[#allocation2 + $0x50] sm:$0xff]
    %v1086 = vld [vmem:[#allocation2 + $0x58] sm:$0xff]
    %v1087 = vld [vmem:[#allocation2 + $0x60] sm:$0xff]
    %v1088 = vld [vmem:[#allocation2 + $0x68] sm:$0xff]
    %v1089 = vld [vmem:[#allocation2 + $0x70] sm:$0xff]
    %v1090 = vld [vmem:[#allocation2 + $0x78] sm:$0xff]
    %v1091 = vld [vmem:[#allocation2 + $0x80] sm:$0xff]
    %v1092 = vld [vmem:[#allocation2 + $0x88] sm:$0xff]
    %v1093 = vld [vmem:[#allocation2 + $0x90] sm:$0xff]
    %v1094 = vld [vmem:[#allocation2 + $0x98] sm:$0xff]
    %v1095 = vld [vmem:[#allocation2 + $0xa0] sm:$0xff]
    %v1096 = vld [vmem:[#allocation2 + $0xa8] sm:$0xff]
    %v1097 = vld [vmem:[#allocation2 + $0xb0] sm:$0xff]
    %v1098 = vld [vmem:[#allocation2 + $0xb8] sm:$0xff]
    %v1099 = vld [vmem:[#allocation2 + $0xc0] sm:$0xff]
    %v1100 = vld [vmem:[#allocation2 + $0xc8] sm:$0xff]
    %v1101 = vld [vmem:[#allocation2 + $0xd0] sm:$0xff]
    %v1102 = vld [vmem:[#allocation2 + $0xd8] sm:$0xff]
    %v1103 = vld [vmem:[#allocation2 + $0xe0] sm:$0xff]
    %v1104 = vld [vmem:[#allocation2 + $0xe8] sm:$0xff]
    %v1105 = vld [vmem:[#allocation2 + $0xf0] sm:$0xff]
    %v1106 = vld [vmem:[#allocation2 + $0xf8] sm:$0xff]
    %v1107 = vld [vmem:[#allocation2 + $0x100] sm:$0xff]
    %v1108 = vld [vmem:[#allocation2 + $0x108] sm:$0xff]
    %v1109 = vld [vmem:[#allocation2 + $0x110] sm:$0xff]
    %v1110 = vld [vmem:[#allocation2 + $0x118] sm:$0xff]
    %v1111 = vld [vmem:[#allocation2 + $0x120] sm:$0xff]
    %v1112 = vld [vmem:[#allocation2 + $0x128] sm:$0xff]
    %v1113 = vld [vmem:[#allocation2 + $0x130] sm:$0xff]
    %v1114 = vld [vmem:[#allocation2 + $0x138] sm:$0xff]
    %v1115 = vld [vmem:[#allocation2 + $0x140] sm:$0xff]
    %v1116 = vld [vmem:[#allocation2 + $0x148] sm:$0xff]
    %v1117 = vld [vmem:[#allocation2 + $0x150] sm:$0xff]
    %v1118 = vld [vmem:[#allocation2 + $0x158] sm:$0xff]
    %v1119 = vld [vmem:[#allocation2 + $0x160] sm:$0xff]
    %v1120 = vld [vmem:[#allocation2 + $0x168] sm:$0xff]
    %v1121 = vld [vmem:[#allocation2 + $0x170] sm:$0xff]
    %v1122 = vld [vmem:[#allocation2 + $0x178] sm:$0xff]
    %v1123 = vld [vmem:[#allocation2 + $0x180] sm:$0xff]
    %v1124 = vld [vmem:[#allocation2 + $0x188] sm:$0xff]
    %v1125 = vld [vmem:[#allocation2 + $0x190] sm:$0xff]
    %v1126 = vld [vmem:[#allocation2 + $0x198] sm:$0xff]
    %v1127 = vld [vmem:[#allocation2 + $0x1a0] sm:$0xff]
    %v1128 = vld [vmem:[#allocation2 + $0x1a8] sm:$0xff]
    %v1129 = vld [vmem:[#allocation2 + $0x1b0] sm:$0xff]
    %v1130 = vld [vmem:[#allocation2 + $0x1b8] sm:$0xff]
    %v1131 = vld [vmem:[#allocation2 + $0x1c0] sm:$0xff]
    %v1132 = vld [vmem:[#allocation2 + $0x1c8] sm:$0xff]
    %v1133 = vld [vmem:[#allocation2 + $0x1d0] sm:$0xff]
    %v1134 = vld [vmem:[#allocation2 + $0x1d8] sm:$0xff]
    %v1135 = vld [vmem:[#allocation2 + $0x1e0] sm:$0xff]
    %v1136 = vld [vmem:[#allocation2 + $0x1e8] sm:$0xff]
    %v1137 = vld [vmem:[#allocation2 + $0x1f0] sm:$0xff]
    %v1138 = vld [vmem:[#allocation2 + $0x1f8] sm:$0xff]
    %v1139 = vld [vmem:[#allocation2 + $0x200] sm:$0xff]
    %v1140 = vld [vmem:[#allocation2 + $0x208] sm:$0xff]
    %v1141 = vld [vmem:[#allocation2 + $0x210] sm:$0xff]
    %v1142 = vld [vmem:[#allocation2 + $0x218] sm:$0xff]
    %v1143 = vld [vmem:[#allocation2 + $0x220] sm:$0xff]
    %v1144 = vld [vmem:[#allocation2 + $0x228] sm:$0xff]
    %v1145 = vld [vmem:[#allocation2 + $0x230] sm:$0xff]
    %v1146 = vld [vmem:[#allocation2 + $0x238] sm:$0xff]
    %v1147 = vld [vmem:[#allocation2 + $0x240] sm:$0xff]
    %v1148 = vld [vmem:[#allocation2 + $0x248] sm:$0xff]
    %v1149 = vld [vmem:[#allocation2 + $0x250] sm:$0xff]
    %v1150 = vld [vmem:[#allocation2 + $0x258] sm:$0xff]
    %v1151 = vld [vmem:[#allocation2 + $0x260] sm:$0xff]
    %v1152 = vld [vmem:[#allocation2 + $0x268] sm:$0xff]
    %v1153 = vld [vmem:[#allocation2 + $0x270] sm:$0xff]
    %v1154 = vld [vmem:[#allocation2 + $0x278] sm:$0xff]
    %v1155 = vld [vmem:[#allocation2 + $0x280] sm:$0xff]
    %v1156 = vld [vmem:[#allocation2 + $0x288] sm:$0xff]
    %v1157 = vld [vmem:[#allocation2 + $0x290] sm:$0xff]
    %v1158 = vld [vmem:[#allocation2 + $0x298] sm:$0xff]
    %v1159 = vld [vmem:[#allocation2 + $0x2a0] sm:$0xff]
    %v1160 = vld [vmem:[#allocation2 + $0x2a8] sm:$0xff]
    %v1161 = vld [vmem:[#allocation2 + $0x2b0] sm:$0xff]
    %v1162 = vld [vmem:[#allocation2 + $0x2b8] sm:$0xff]
    %v1163 = vld [vmem:[#allocation2 + $0x2c0] sm:$0xff]
    %v1164 = vld [vmem:[#allocation2 + $0x2c8] sm:$0xff]
    %v1165 = vld [vmem:[#allocation2 + $0x2d0] sm:$0xff]
    %v1166 = vld [vmem:[#allocation2 + $0x2d8] sm:$0xff]
    %v1167 = vld [vmem:[#allocation2 + $0x2e0] sm:$0xff]
    %v1168 = vld [vmem:[#allocation2 + $0x2e8] sm:$0xff]
    %v1169 = vld [vmem:[#allocation2 + $0x2f0] sm:$0xff]
    %v1170 = vld [vmem:[#allocation2 + $0x2f8] sm:$0xff]
    %v1171 = vld [vmem:[#allocation2 + $0x300] sm:$0xff]
    %v1172 = vld [vmem:[#allocation2 + $0x308] sm:$0xff]
    %v1173 = vld [vmem:[#allocation2 + $0x310] sm:$0xff]
    %v1174 = vld [vmem:[#allocation2 + $0x318] sm:$0xff]
    %v1175 = vld [vmem:[#allocation2 + $0x320] sm:$0xff]
    %v1176 = vld [vmem:[#allocation2 + $0x328] sm:$0xff]
    %v1177 = vld [vmem:[#allocation2 + $0x330] sm:$0xff]
    %v1178 = vld [vmem:[#allocation2 + $0x338] sm:$0xff]
    %v1179 = vld [vmem:[#allocation2 + $0x340] sm:$0xff]
    %v1180 = vld [vmem:[#allocation2 + $0x348] sm:$0xff]
    %v1181 = vld [vmem:[#allocation2 + $0x350] sm:$0xff]
    %v1182 = vld [vmem:[#allocation2 + $0x358] sm:$0xff]
    %v1183 = vld [vmem:[#allocation2 + $0x360] sm:$0xff]
    %v1184 = vld [vmem:[#allocation2 + $0x368] sm:$0xff]
    %v1185 = vld [vmem:[#allocation2 + $0x370] sm:$0xff]
    %v1186 = vld [vmem:[#allocation2 + $0x378] sm:$0xff]
    %v1187 = vld [vmem:[#allocation2 + $0x380] sm:$0xff]
    %v1188 = vld [vmem:[#allocation2 + $0x388] sm:$0xff]
    %v1189 = vld [vmem:[#allocation2 + $0x390] sm:$0xff]
    %v1190 = vld [vmem:[#allocation2 + $0x398] sm:$0xff]
    %v1191 = vld [vmem:[#allocation2 + $0x3a0] sm:$0xff]
    %v1192 = vld [vmem:[#allocation2 + $0x3a8] sm:$0xff]
    %v1193 = vld [vmem:[#allocation2 + $0x3b0] sm:$0xff]
    %v1194 = vld [vmem:[#allocation2 + $0x3b8] sm:$0xff]
    %v1195 = vld [vmem:[#allocation2 + $0x3c0] sm:$0xff]
    %v1196 = vld [vmem:[#allocation2 + $0x3c8] sm:$0xff]
    %v1197 = vld [vmem:[#allocation2 + $0x3d0] sm:$0xff]
    %v1198 = vld [vmem:[#allocation2 + $0x3d8] sm:$0xff]
    %v1199 = vld [vmem:[#allocation2 + $0x3e0] sm:$0xff]
    %v1200 = vld [vmem:[#allocation2 + $0x3e8] sm:$0xff]
    %v1201 = vld [vmem:[#allocation2 + $0x3f0] sm:$0xff]
    %v1202 = vld [vmem:[#allocation2 + $0x3f8] sm:$0xff]
    %v1203 = vld [vmem:[%s6] sm:$0xff]
    %v1204 = vld [vmem:[%s6 + $0x8] sm:$0xff]
    %v1205 = vld [vmem:[%s6 + $0x10] sm:$0xff]
    %v1206 = vld [vmem:[%s6 + $0x18] sm:$0xff]
    %v1207 = vld [vmem:[%s6 + $0x20] sm:$0xff]
    %v1208 = vld [vmem:[%s6 + $0x28] sm:$0xff]
    %v1209 = vld [vmem:[%s6 + $0x30] sm:$0xff]
    %v1210 = vld [vmem:[%s6 + $0x38] sm:$0xff]
    %v1211 = vld [vmem:[%s6 + $0x40] sm:$0xff]
    %v1212 = vld [vmem:[%s6 + $0x48] sm:$0xff]
    %v1213 = vld [vmem:[%s6 + $0x50] sm:$0xff]
    %v1214 = vld [vmem:[%s6 + $0x58] sm:$0xff]
    %v1215 = vld [vmem:[%s6 + $0x60] sm:$0xff]
    %v1216 = vld [vmem:[%s6 + $0x68] sm:$0xff]
    %v1217 = vld [vmem:[%s6 + $0x70] sm:$0xff]
    %v1218 = vld [vmem:[%s6 + $0x78] sm:$0xff]
    %v1219 = vld [vmem:[%s6 + $0x80] sm:$0xff]
    %v1220 = vld [vmem:[%s6 + $0x88] sm:$0xff]
    %v1221 = vld [vmem:[%s6 + $0x90] sm:$0xff]
    %v1222 = vld [vmem:[%s6 + $0x98] sm:$0xff]
    %v1223 = vld [vmem:[%s6 + $0xa0] sm:$0xff]
    %v1224 = vld [vmem:[%s6 + $0xa8] sm:$0xff]
    %v1225 = vld [vmem:[%s6 + $0xb0] sm:$0xff]
    %v1226 = vld [vmem:[%s6 + $0xb8] sm:$0xff]
    %v1227 = vld [vmem:[%s6 + $0xc0] sm:$0xff]
    %v1228 = vld [vmem:[%s6 + $0xc8] sm:$0xff]
    %v1229 = vld [vmem:[%s6 + $0xd0] sm:$0xff]
    %v1230 = vld [vmem:[%s6 + $0xd8] sm:$0xff]
    %v1231 = vld [vmem:[%s6 + $0xe0] sm:$0xff]
    %v1232 = vld [vmem:[%s6 + $0xe8] sm:$0xff]
    %v1233 = vld [vmem:[%s6 + $0xf0] sm:$0xff]
    %v1234 = vld [vmem:[%s6 + $0xf8] sm:$0xff]
    %v1235 = vld [vmem:[%s7] sm:$0x3]
    %1236 = vmatpush.msra.mxu0 %v1135
    %1237 = vmatpush.msra.mxu0 %v1131
    %1238 = vmatpush.msra.mxu0 %v1127
    %1239 = vmatpush.msra.mxu0 %v1123
    %1240 = vmatpush.msra.mxu0 %v1119
    %1241 = vmatpush.msra.mxu0 %v1115
    %1242 = vmatpush.msra.mxu0 %v1111
    %1243 = vmatpush.msra.mxu0 %v1107
    %1244 = vmatpush.msra.mxu0 %v1103
    %1245 = vmatpush.msra.mxu0 %v1099
    %1246 = vmatpush.msra.mxu0 %v1095
    %1247 = vmatpush.msra.mxu0 %v1091
    %1248 = vmatpush.msra.mxu0 %v1087
    %1249 = vmatpush.msra.mxu0 %v1083
    %1250 = vmatpush.msra.mxu0 %v1079
    %1251 = vmatpush.msra.mxu0 %v1075
    %1252 = vmatmul.f32.gmra.mxu0 %v1071
    %v1253 = vpop.f32.mrf.mxu0
    %v1254 = vadd.f32 0.0, %v1253
    %1255 = vmatmul.f32.gmra.mxu0 %v1073
    %v1256 = vpop.f32.mrf.mxu0
    %v1257 = vadd.f32 0.0, %v1256
    %1258 = vdwg.mxu0
    %1259 = vmatpush.msra.mxu0 %v1199
    %1260 = vmatpush.msra.mxu0 %v1195
    %1261 = vmatpush.msra.mxu0 %v1191
    %1262 = vmatpush.msra.mxu0 %v1187
    %1263 = vmatpush.msra.mxu0 %v1183
    %1264 = vmatpush.msra.mxu0 %v1179
    %1265 = vmatpush.msra.mxu0 %v1175
    %1266 = vmatpush.msra.mxu0 %v1171
    %1267 = vmatpush.msra.mxu0 %v1167
    %1268 = vmatpush.msra.mxu0 %v1163
    %1269 = vmatpush.msra.mxu0 %v1159
    %1270 = vmatpush.msra.mxu0 %v1155
    %1271 = vmatpush.msra.mxu0 %v1151
    %1272 = vmatpush.msra.mxu0 %v1147
    %1273 = vmatpush.msra.mxu0 %v1143
    %1274 = vmatpush.msra.mxu0 %v1139
    %1275 = vmatmul.f32.gmra.mxu0 %v1072
    %v1276 = vpop.f32.mrf.mxu0
    %v1277 = vadd.f32 %v1254, %v1276
    %1278 = vmatmul.f32.gmra.mxu0 %v1074
    %v1279 = vpop.f32.mrf.mxu0
    %v1280 = vadd.f32 %v1257, %v1279
    %1281 = vdwg.mxu0
    %1282 = vmatpush.msra.mxu0 %v1136
    %1283 = vmatpush.msra.mxu0 %v1132
    %1284 = vmatpush.msra.mxu0 %v1128
    %1285 = vmatpush.msra.mxu0 %v1124
    %1286 = vmatpush.msra.mxu0 %v1120
    %1287 = vmatpush.msra.mxu0 %v1116
    %1288 = vmatpush.msra.mxu0 %v1112
    %1289 = vmatpush.msra.mxu0 %v1108
    %1290 = vmatpush.msra.mxu0 %v1104
    %1291 = vmatpush.msra.mxu0 %v1100
    %1292 = vmatpush.msra.mxu0 %v1096
    %1293 = vmatpush.msra.mxu0 %v1092
    %1294 = vmatpush.msra.mxu0 %v1088
    %1295 = vmatpush.msra.mxu0 %v1084
    %1296 = vmatpush.msra.mxu0 %v1080
    %1297 = vmatpush.msra.mxu0 %v1076
    %1298 = vmatmul.f32.gmra.mxu0 %v1071
    %v1299 = vpop.f32.mrf.mxu0
    %v1300 = vadd.f32 0.0, %v1299
    %1301 = vmatmul.f32.gmra.mxu0 %v1073
    %v1302 = vpop.f32.mrf.mxu0
    %v1303 = vadd.f32 0.0, %v1302
    %1304 = vdwg.mxu0
    %1305 = vmatpush.msra.mxu0 %v1200
    %1306 = vmatpush.msra.mxu0 %v1196
    %1307 = vmatpush.msra.mxu0 %v1192
    %1308 = vmatpush.msra.mxu0 %v1188
    %1309 = vmatpush.msra.mxu0 %v1184
    %1310 = vmatpush.msra.mxu0 %v1180
    %1311 = vmatpush.msra.mxu0 %v1176
    %1312 = vmatpush.msra.mxu0 %v1172
    %1313 = vmatpush.msra.mxu0 %v1168
    %1314 = vmatpush.msra.mxu0 %v1164
    %1315 = vmatpush.msra.mxu0 %v1160
    %1316 = vmatpush.msra.mxu0 %v1156
    %1317 = vmatpush.msra.mxu0 %v1152
    %1318 = vmatpush.msra.mxu0 %v1148
    %1319 = vmatpush.msra.mxu0 %v1144
    %1320 = vmatpush.msra.mxu0 %v1140
    %1321 = vmatmul.f32.gmra.mxu0 %v1072
    %v1322 = vpop.f32.mrf.mxu0
    %v1323 = vadd.f32 %v1300, %v1322
    %1324 = vmatmul.f32.gmra.mxu0 %v1074
    %v1325 = vpop.f32.mrf.mxu0
    %v1326 = vadd.f32 %v1303, %v1325
    %1327 = vdwg.mxu0
    %1328 = vmatpush.msra.mxu0 %v1137
    %1329 = vmatpush.msra.mxu0 %v1133
    %1330 = vmatpush.msra.mxu0 %v1129
    %1331 = vmatpush.msra.mxu0 %v1125
    %1332 = vmatpush.msra.mxu0 %v1121
    %1333 = vmatpush.msra.mxu0 %v1117
    %1334 = vmatpush.msra.mxu0 %v1113
    %1335 = vmatpush.msra.mxu0 %v1109
    %1336 = vmatpush.msra.mxu0 %v1105
    %1337 = vmatpush.msra.mxu0 %v1101
    %1338 = vmatpush.msra.mxu0 %v1097
    %1339 = vmatpush.msra.mxu0 %v1093
    %1340 = vmatpush.msra.mxu0 %v1089
    %1341 = vmatpush.msra.mxu0 %v1085
    %1342 = vmatpush.msra.mxu0 %v1081
    %1343 = vmatpush.msra.mxu0 %v1077
    %1344 = vmatmul.f32.gmra.mxu0 %v1071
    %v1345 = vpop.f32.mrf.mxu0
    %v1346 = vadd.f32 0.0, %v1345
    %1347 = vmatmul.f32.gmra.mxu0 %v1073
    %v1348 = vpop.f32.mrf.mxu0
    %v1349 = vadd.f32 0.0, %v1348
    %1350 = vdwg.mxu0
    %1351 = vmatpush.msra.mxu0 %v1201
    %1352 = vmatpush.msra.mxu0 %v1197
    %1353 = vmatpush.msra.mxu0 %v1193
    %1354 = vmatpush.msra.mxu0 %v1189
    %1355 = vmatpush.msra.mxu0 %v1185
    %1356 = vmatpush.msra.mxu0 %v1181
    %1357 = vmatpush.msra.mxu0 %v1177
    %1358 = vmatpush.msra.mxu0 %v1173
    %1359 = vmatpush.msra.mxu0 %v1169
    %1360 = vmatpush.msra.mxu0 %v1165
    %1361 = vmatpush.msra.mxu0 %v1161
    %1362 = vmatpush.msra.mxu0 %v1157
    %1363 = vmatpush.msra.mxu0 %v1153
    %1364 = vmatpush.msra.mxu0 %v1149
    %1365 = vmatpush.msra.mxu0 %v1145
    %1366 = vmatpush.msra.mxu0 %v1141
    %1367 = vmatmul.f32.gmra.mxu0 %v1072
    %v1368 = vpop.f32.mrf.mxu0
    %v1369 = vadd.f32 %v1346, %v1368
    %1370 = vmatmul.f32.gmra.mxu0 %v1074
    %v1371 = vpop.f32.mrf.mxu0
    %v1372 = vadd.f32 %v1349, %v1371
    %1373 = vdwg.mxu0
    %1374 = vmatpush.msra.mxu0 %v1138
    %1375 = vmatpush.msra.mxu0 %v1134
    %1376 = vmatpush.msra.mxu0 %v1130
    %1377 = vmatpush.msra.mxu0 %v1126
    %1378 = vmatpush.msra.mxu0 %v1122
    %1379 = vmatpush.msra.mxu0 %v1118
    %1380 = vmatpush.msra.mxu0 %v1114
    %1381 = vmatpush.msra.mxu0 %v1110
    %1382 = vmatpush.msra.mxu0 %v1106
    %1383 = vmatpush.msra.mxu0 %v1102
    %1384 = vmatpush.msra.mxu0 %v1098
    %1385 = vmatpush.msra.mxu0 %v1094
    %1386 = vmatpush.msra.mxu0 %v1090
    %1387 = vmatpush.msra.mxu0 %v1086
    %1388 = vmatpush.msra.mxu0 %v1082
    %1389 = vmatpush.msra.mxu0 %v1078
    %1390 = vmatmul.f32.gmra.mxu0 %v1071
    %v1391 = vpop.f32.mrf.mxu0
    %v1392 = vadd.f32 0.0, %v1391
    %1393 = vmatmul.f32.gmra.mxu0 %v1073
    %v1394 = vpop.f32.mrf.mxu0
    %v1395 = vadd.f32 0.0, %v1394
    %1396 = vdwg.mxu0
    %1397 = vmatpush.msra.mxu0 %v1202
    %1398 = vmatpush.msra.mxu0 %v1198
    %1399 = vmatpush.msra.mxu0 %v1194
    %1400 = vmatpush.msra.mxu0 %v1190
    %1401 = vmatpush.msra.mxu0 %v1186
    %1402 = vmatpush.msra.mxu0 %v1182
    %1403 = vmatpush.msra.mxu0 %v1178
    %1404 = vmatpush.msra.mxu0 %v1174
    %1405 = vmatpush.msra.mxu0 %v1170
    %1406 = vmatpush.msra.mxu0 %v1166
    %1407 = vmatpush.msra.mxu0 %v1162
    %1408 = vmatpush.msra.mxu0 %v1158
    %1409 = vmatpush.msra.mxu0 %v1154
    %1410 = vmatpush.msra.mxu0 %v1150
    %1411 = vmatpush.msra.mxu0 %v1146
    %1412 = vmatpush.msra.mxu0 %v1142
    %1413 = vmatmul.f32.gmra.mxu0 %v1072
    %v1414 = vpop.f32.mrf.mxu0
    %v1415 = vadd.f32 %v1392, %v1414
    %1416 = vmatmul.f32.gmra.mxu0 %v1074
    %v1417 = vpop.f32.mrf.mxu0
    %v1418 = vadd.f32 %v1395, %v1417
    %1419 = vdwg.mxu0
    %v1424 = vrot.slane %v1415, 7
    %v1425 = vrot.slane %v1418, 7
    %v1426 = vsel %vm204, %v1369, %v1424
    %v1427 = vsel %vm206, %v1369, %v1424
    %v1428 = vrot.slane %v1427, 1
    %v1429 = vsel %vm209, %v1369, %v1424
    %v1430 = vrot.slane %v1429, 2
    %v1431 = vsel %vm212, %v1369, %v1424
    %v1432 = vrot.slane %v1431, 3
    %v1433 = vsel %vm215, %v1369, %v1424
    %v1434 = vrot.slane %v1433, 4
    %v1435 = vsel %vm218, %v1369, %v1424
    %v1436 = vrot.slane %v1435, 5
    %v1437 = vsel %vm221, %v1369, %v1424
    %v1438 = vrot.slane %v1437, 6
    %v1439 = vsel %vm224, %v1424, %v1369
    %v1440 = vrot.slane %v1439, 7
    %v1441 = vsel %vm204, %v1372, %v1425
    %v1442 = vsel %vm206, %v1372, %v1425
    %v1443 = vrot.slane %v1442, 1
    %v1444 = vsel %vm209, %v1372, %v1425
    %v1445 = vrot.slane %v1444, 2
    %v1446 = vsel %vm212, %v1372, %v1425
    %v1447 = vrot.slane %v1446, 3
    %v1448 = vsel %vm215, %v1372, %v1425
    %v1449 = vrot.slane %v1448, 4
    %v1450 = vsel %vm218, %v1372, %v1425
    %v1451 = vrot.slane %v1450, 5
    %v1452 = vsel %vm221, %v1372, %v1425
    %v1453 = vrot.slane %v1452, 6
    %v1454 = vsel %vm224, %v1425, %v1372
    %v1455 = vrot.slane %v1454, 7
    %v1456 = vperm.slane %v1426, 0
    %v1457 = vperm.slane %v1426, 1
    %v1458 = vperm.slane %v1428, 0
    %v1459 = vperm.slane %v1428, 1
    %v1460 = vperm.slane %v1430, 0
    %v1461 = vperm.slane %v1430, 1
    %v1462 = vperm.slane %v1432, 0
    %v1463 = vperm.slane %v1432, 1
    %v1464 = vperm.slane %v1434, 0
    %v1465 = vperm.slane %v1434, 1
    %v1466 = vperm.slane %v1436, 0
    %v1467 = vperm.slane %v1436, 1
    %v1468 = vperm.slane %v1438, 0
    %v1469 = vperm.slane %v1438, 1
    %v1470 = vperm.slane %v1440, 0
    %v1471 = vperm.slane %v1440, 1
    %v1472 = vperm.slane %v1441, 0
    %v1473 = vperm.slane %v1441, 1
    %v1474 = vperm.slane %v1443, 0
    %v1475 = vperm.slane %v1443, 1
    %v1476 = vperm.slane %v1445, 0
    %v1477 = vperm.slane %v1445, 1
    %v1478 = vperm.slane %v1447, 0
    %v1479 = vperm.slane %v1447, 1
    %v1480 = vperm.slane %v1449, 0
    %v1481 = vperm.slane %v1449, 1
    %v1482 = vperm.slane %v1451, 0
    %v1483 = vperm.slane %v1451, 1
    %v1484 = vperm.slane %v1453, 0
    %v1485 = vperm.slane %v1453, 1
    %v1486 = vperm.slane %v1455, 0
    %v1487 = vperm.slane %v1455, 1
    %v1520 = vadd.f32 %v1277, %v1456
    %v1521 = vadd.f32 %v1323, %v1457
    %v1522 = vadd.f32 %v1280, %v1456
    %v1523 = vadd.f32 %v1326, %v1457
    %v1524 = vadd.f32 %v1277, %v1458
    %v1525 = vadd.f32 %v1323, %v1459
    %v1526 = vadd.f32 %v1280, %v1458
    %v1527 = vadd.f32 %v1326, %v1459
    %v1528 = vadd.f32 %v1277, %v1460
    %v1529 = vadd.f32 %v1323, %v1461
    %v1530 = vadd.f32 %v1280, %v1460
    %v1531 = vadd.f32 %v1326, %v1461
    %v1532 = vadd.f32 %v1277, %v1462
    %v1533 = vadd.f32 %v1323, %v1463
    %v1534 = vadd.f32 %v1280, %v1462
    %v1535 = vadd.f32 %v1326, %v1463
    %v1536 = vadd.f32 %v1277, %v1464
    %v1537 = vadd.f32 %v1323, %v1465
    %v1538 = vadd.f32 %v1280, %v1464
    %v1539 = vadd.f32 %v1326, %v1465
    %v1540 = vadd.f32 %v1277, %v1466
    %v1541 = vadd.f32 %v1323, %v1467
    %v1542 = vadd.f32 %v1280, %v1466
    %v1543 = vadd.f32 %v1326, %v1467
    %v1544 = vadd.f32 %v1277, %v1468
    %v1545 = vadd.f32 %v1323, %v1469
    %v1546 = vadd.f32 %v1280, %v1468
    %v1547 = vadd.f32 %v1326, %v1469
    %v1548 = vadd.f32 %v1277, %v1470
    %v1549 = vadd.f32 %v1323, %v1471
    %v1550 = vadd.f32 %v1280, %v1470
    %v1551 = vadd.f32 %v1326, %v1471
    %v1552 = vadd.f32 %v1277, %v1472
    %v1553 = vadd.f32 %v1323, %v1473
    %v1554 = vadd.f32 %v1280, %v1472
    %v1555 = vadd.f32 %v1326, %v1473
    %v1556 = vadd.f32 %v1277, %v1474
    %v1557 = vadd.f32 %v1323, %v1475
    %v1558 = vadd.f32 %v1280, %v1474
    %v1559 = vadd.f32 %v1326, %v1475
    %v1560 = vadd.f32 %v1277, %v1476
    %v1561 = vadd.f32 %v1323, %v1477
    %v1562 = vadd.f32 %v1280, %v1476
    %v1563 = vadd.f32 %v1326, %v1477
    %v1564 = vadd.f32 %v1277, %v1478
    %v1565 = vadd.f32 %v1323, %v1479
    %v1566 = vadd.f32 %v1280, %v1478
    %v1567 = vadd.f32 %v1326, %v1479
    %v1568 = vadd.f32 %v1277, %v1480
    %v1569 = vadd.f32 %v1323, %v1481
    %v1570 = vadd.f32 %v1280, %v1480
    %v1571 = vadd.f32 %v1326, %v1481
    %v1572 = vadd.f32 %v1277, %v1482
    %v1573 = vadd.f32 %v1323, %v1483
    %v1574 = vadd.f32 %v1280, %v1482
    %v1575 = vadd.f32 %v1326, %v1483
    %v1576 = vadd.f32 %v1277, %v1484
    %v1577 = vadd.f32 %v1323, %v1485
    %v1578 = vadd.f32 %v1280, %v1484
    %v1579 = vadd.f32 %v1326, %v1485
    %v1580 = vadd.f32 %v1277, %v1486
    %v1581 = vadd.f32 %v1323, %v1487
    %v1582 = vadd.f32 %v1280, %v1486
    %v1583 = vadd.f32 %v1326, %v1487
    %vm1584 = vcmp.gt.f32.partialorder %v1520, 0.0
    %vm1585 = vcmp.gt.f32.partialorder %v1521, 0.0
    %vm1586 = vcmp.gt.f32.partialorder %v1522, 0.0
    %vm1587 = vcmp.gt.f32.partialorder %v1523, 0.0
    %vm1588 = vcmp.gt.f32.partialorder %v1524, 0.0
    %vm1589 = vcmp.gt.f32.partialorder %v1525, 0.0
    %vm1590 = vcmp.gt.f32.partialorder %v1526, 0.0
    %vm1591 = vcmp.gt.f32.partialorder %v1527, 0.0
    %vm1592 = vcmp.gt.f32.partialorder %v1528, 0.0
    %vm1593 = vcmp.gt.f32.partialorder %v1529, 0.0
    %vm1594 = vcmp.gt.f32.partialorder %v1530, 0.0
    %vm1595 = vcmp.gt.f32.partialorder %v1531, 0.0
    %vm1596 = vcmp.gt.f32.partialorder %v1532, 0.0
    %vm1597 = vcmp.gt.f32.partialorder %v1533, 0.0
    %vm1598 = vcmp.gt.f32.partialorder %v1534, 0.0
    %vm1599 = vcmp.gt.f32.partialorder %v1535, 0.0
    %vm1600 = vcmp.gt.f32.partialorder %v1536, 0.0
    %vm1601 = vcmp.gt.f32.partialorder %v1537, 0.0
    %vm1602 = vcmp.gt.f32.partialorder %v1538, 0.0
    %vm1603 = vcmp.gt.f32.partialorder %v1539, 0.0
    %vm1604 = vcmp.gt.f32.partialorder %v1540, 0.0
    %vm1605 = vcmp.gt.f32.partialorder %v1541, 0.0
    %vm1606 = vcmp.gt.f32.partialorder %v1542, 0.0
    %vm1607 = vcmp.gt.f32.partialorder %v1543, 0.0
    %vm1608 = vcmp.gt.f32.partialorder %v1544, 0.0
    %vm1609 = vcmp.gt.f32.partialorder %v1545, 0.0
    %vm1610 = vcmp.gt.f32.partialorder %v1546, 0.0
    %vm1611 = vcmp.gt.f32.partialorder %v1547, 0.0
    %vm1612 = vcmp.gt.f32.partialorder %v1548, 0.0
    %vm1613 = vcmp.gt.f32.partialorder %v1549, 0.0
    %vm1614 = vcmp.gt.f32.partialorder %v1550, 0.0
    %vm1615 = vcmp.gt.f32.partialorder %v1551, 0.0
    %vm1616 = vcmp.gt.f32.partialorder %v1552, 0.0
    %vm1617 = vcmp.gt.f32.partialorder %v1553, 0.0
    %vm1618 = vcmp.gt.f32.partialorder %v1554, 0.0
    %vm1619 = vcmp.gt.f32.partialorder %v1555, 0.0
    %vm1620 = vcmp.gt.f32.partialorder %v1556, 0.0
    %vm1621 = vcmp.gt.f32.partialorder %v1557, 0.0
    %vm1622 = vcmp.gt.f32.partialorder %v1558, 0.0
    %vm1623 = vcmp.gt.f32.partialorder %v1559, 0.0
    %vm1624 = vcmp.gt.f32.partialorder %v1560, 0.0
    %vm1625 = vcmp.gt.f32.partialorder %v1561, 0.0
    %vm1626 = vcmp.gt.f32.partialorder %v1562, 0.0
    %vm1627 = vcmp.gt.f32.partialorder %v1563, 0.0
    %vm1628 = vcmp.gt.f32.partialorder %v1564, 0.0
    %vm1629 = vcmp.gt.f32.partialorder %v1565, 0.0
    %vm1630 = vcmp.gt.f32.partialorder %v1566, 0.0
    %vm1631 = vcmp.gt.f32.partialorder %v1567, 0.0
    %vm1632 = vcmp.gt.f32.partialorder %v1568, 0.0
    %vm1633 = vcmp.gt.f32.partialorder %v1569, 0.0
    %vm1634 = vcmp.gt.f32.partialorder %v1570, 0.0
    %vm1635 = vcmp.gt.f32.partialorder %v1571, 0.0
    %vm1636 = vcmp.gt.f32.partialorder %v1572, 0.0
    %vm1637 = vcmp.gt.f32.partialorder %v1573, 0.0
    %vm1638 = vcmp.gt.f32.partialorder %v1574, 0.0
    %vm1639 = vcmp.gt.f32.partialorder %v1575, 0.0
    %vm1640 = vcmp.gt.f32.partialorder %v1576, 0.0
    %vm1641 = vcmp.gt.f32.partialorder %v1577, 0.0
    %vm1642 = vcmp.gt.f32.partialorder %v1578, 0.0
    %vm1643 = vcmp.gt.f32.partialorder %v1579, 0.0
    %vm1644 = vcmp.gt.f32.partialorder %v1580, 0.0
    %vm1645 = vcmp.gt.f32.partialorder %v1581, 0.0
    %vm1646 = vcmp.gt.f32.partialorder %v1582, 0.0
    %vm1647 = vcmp.gt.f32.partialorder %v1583, 0.0
    %v1648 = vmul.f32 %v1520, 0.2
    %v1649 = vmul.f32 %v1521, 0.2
    %v1650 = vmul.f32 %v1522, 0.2
    %v1651 = vmul.f32 %v1523, 0.2
    %v1652 = vmul.f32 %v1524, 0.2
    %v1653 = vmul.f32 %v1525, 0.2
    %v1654 = vmul.f32 %v1526, 0.2
    %v1655 = vmul.f32 %v1527, 0.2
    %v1656 = vmul.f32 %v1528, 0.2
    %v1657 = vmul.f32 %v1529, 0.2
    %v1658 = vmul.f32 %v1530, 0.2
    %v1659 = vmul.f32 %v1531, 0.2
    %v1660 = vmul.f32 %v1532, 0.2
    %v1661 = vmul.f32 %v1533, 0.2
    %v1662 = vmul.f32 %v1534, 0.2
    %v1663 = vmul.f32 %v1535, 0.2
    %v1664 = vmul.f32 %v1536, 0.2
    %v1665 = vmul.f32 %v1537, 0.2
    %v1666 = vmul.f32 %v1538, 0.2
    %v1667 = vmul.f32 %v1539, 0.2
    %v1668 = vmul.f32 %v1540, 0.2
    %v1669 = vmul.f32 %v1541, 0.2
    %v1670 = vmul.f32 %v1542, 0.2
    %v1671 = vmul.f32 %v1543, 0.2
    %v1672 = vmul.f32 %v1544, 0.2
    %v1673 = vmul.f32 %v1545, 0.2
    %v1674 = vmul.f32 %v1546, 0.2
    %v1675 = vmul.f32 %v1547, 0.2
    %v1676 = vmul.f32 %v1548, 0.2
    %v1677 = vmul.f32 %v1549, 0.2
    %v1678 = vmul.f32 %v1550, 0.2
    %v1679 = vmul.f32 %v1551, 0.2
    %v1680 = vmul.f32 %v1552, 0.2
    %v1681 = vmul.f32 %v1553, 0.2
    %v1682 = vmul.f32 %v1554, 0.2
    %v1683 = vmul.f32 %v1555, 0.2
    %v1684 = vmul.f32 %v1556, 0.2
    %v1685 = vmul.f32 %v1557, 0.2
    %v1686 = vmul.f32 %v1558, 0.2
    %v1687 = vmul.f32 %v1559, 0.2
    %v1688 = vmul.f32 %v1560, 0.2
    %v1689 = vmul.f32 %v1561, 0.2
    %v1690 = vmul.f32 %v1562, 0.2
    %v1691 = vmul.f32 %v1563, 0.2
    %v1692 = vmul.f32 %v1564, 0.2
    %v1693 = vmul.f32 %v1565, 0.2
    %v1694 = vmul.f32 %v1566, 0.2
    %v1695 = vmul.f32 %v1567, 0.2
    %v1696 = vmul.f32 %v1568, 0.2
    %v1697 = vmul.f32 %v1569, 0.2
    %v1698 = vmul.f32 %v1570, 0.2
    %v1699 = vmul.f32 %v1571, 0.2
    %v1700 = vmul.f32 %v1572, 0.2
    %v1701 = vmul.f32 %v1573, 0.2
    %v1702 = vmul.f32 %v1574, 0.2
    %v1703 = vmul.f32 %v1575, 0.2
    %v1704 = vmul.f32 %v1576, 0.2
    %v1705 = vmul.f32 %v1577, 0.2
    %v1706 = vmul.f32 %v1578, 0.2
    %v1707 = vmul.f32 %v1579, 0.2
    %v1708 = vmul.f32 %v1580, 0.2
    %v1709 = vmul.f32 %v1581, 0.2
    %v1710 = vmul.f32 %v1582, 0.2
    %v1711 = vmul.f32 %v1583, 0.2
    %v1712 = vsel %vm1584, %v1520, %v1648
    %v1713 = vsel %vm1585, %v1521, %v1649
    %v1714 = vsel %vm1586, %v1522, %v1650
    %v1715 = vsel %vm1587, %v1523, %v1651
    %v1716 = vsel %vm1588, %v1524, %v1652
    %v1717 = vsel %vm1589, %v1525, %v1653
    %v1718 = vsel %vm1590, %v1526, %v1654
    %v1719 = vsel %vm1591, %v1527, %v1655
    %v1720 = vsel %vm1592, %v1528, %v1656
    %v1721 = vsel %vm1593, %v1529, %v1657
    %v1722 = vsel %vm1594, %v1530, %v1658
    %v1723 = vsel %vm1595, %v1531, %v1659
    %v1724 = vsel %vm1596, %v1532, %v1660
    %v1725 = vsel %vm1597, %v1533, %v1661
    %v1726 = vsel %vm1598, %v1534, %v1662
    %v1727 = vsel %vm1599, %v1535, %v1663
    %v1728 = vsel %vm1600, %v1536, %v1664
    %v1729 = vsel %vm1601, %v1537, %v1665
    %v1730 = vsel %vm1602, %v1538, %v1666
    %v1731 = vsel %vm1603, %v1539, %v1667
    %v1732 = vsel %vm1604, %v1540, %v1668
    %v1733 = vsel %vm1605, %v1541, %v1669
    %v1734 = vsel %vm1606, %v1542, %v1670
    %v1735 = vsel %vm1607, %v1543, %v1671
    %v1736 = vsel %vm1608, %v1544, %v1672
    %v1737 = vsel %vm1609, %v1545, %v1673
    %v1738 = vsel %vm1610, %v1546, %v1674
    %v1739 = vsel %vm1611, %v1547, %v1675
    %v1740 = vsel %vm1612, %v1548, %v1676
    %v1741 = vsel %vm1613, %v1549, %v1677
    %v1742 = vsel %vm1614, %v1550, %v1678
    %v1743 = vsel %vm1615, %v1551, %v1679
    %v1744 = vsel %vm1616, %v1552, %v1680
    %v1745 = vsel %vm1617, %v1553, %v1681
    %v1746 = vsel %vm1618, %v1554, %v1682
    %v1747 = vsel %vm1619, %v1555, %v1683
    %v1748 = vsel %vm1620, %v1556, %v1684
    %v1749 = vsel %vm1621, %v1557, %v1685
    %v1750 = vsel %vm1622, %v1558, %v1686
    %v1751 = vsel %vm1623, %v1559, %v1687
    %v1752 = vsel %vm1624, %v1560, %v1688
    %v1753 = vsel %vm1625, %v1561, %v1689
    %v1754 = vsel %vm1626, %v1562, %v1690
    %v1755 = vsel %vm1627, %v1563, %v1691
    %v1756 = vsel %vm1628, %v1564, %v1692
    %v1757 = vsel %vm1629, %v1565, %v1693
    %v1758 = vsel %vm1630, %v1566, %v1694
    %v1759 = vsel %vm1631, %v1567, %v1695
    %v1760 = vsel %vm1632, %v1568, %v1696
    %v1761 = vsel %vm1633, %v1569, %v1697
    %v1762 = vsel %vm1634, %v1570, %v1698
    %v1763 = vsel %vm1635, %v1571, %v1699
    %v1764 = vsel %vm1636, %v1572, %v1700
    %v1765 = vsel %vm1637, %v1573, %v1701
    %v1766 = vsel %vm1638, %v1574, %v1702
    %v1767 = vsel %vm1639, %v1575, %v1703
    %v1768 = vsel %vm1640, %v1576, %v1704
    %v1769 = vsel %vm1641, %v1577, %v1705
    %v1770 = vsel %vm1642, %v1578, %v1706
    %v1771 = vsel %vm1643, %v1579, %v1707
    %v1772 = vsel %vm1644, %v1580, %v1708
    %v1773 = vsel %vm1645, %v1581, %v1709
    %v1774 = vsel %vm1646, %v1582, %v1710
    %v1775 = vsel %vm1647, %v1583, %v1711
    %1776 = vmatpush.msra.mxu0 %v1218
    %1777 = vmatpush.msra.mxu0 %v1217
    %1778 = vmatpush.msra.mxu0 %v1216
    %1779 = vmatpush.msra.mxu0 %v1215
    %1780 = vmatpush.msra.mxu0 %v1214
    %1781 = vmatpush.msra.mxu0 %v1213
    %1782 = vmatpush.msra.mxu0 %v1212
    %1783 = vmatpush.msra.mxu0 %v1211
    %1784 = vmatpush.msra.mxu0 %v1210
    %1785 = vmatpush.msra.mxu0 %v1209
    %1786 = vmatpush.msra.mxu0 %v1208
    %1787 = vmatpush.msra.mxu0 %v1207
    %1788 = vmatpush.msra.mxu0 %v1206
    %1789 = vmatpush.msra.mxu0 %v1205
    %1790 = vmatpush.msra.mxu0 %v1204
    %1791 = vmatpush.msra.mxu0 %v1203
    %1792 = vmatmul.f32.gmra.mxu0 %v1712
    %v1793 = vpop.f32.mrf.mxu0
    %v1794 = vadd.f32 0.0, %v1793
    %1795 = vmatmul.f32.gmra.mxu0 %v1714
    %v1796 = vpop.f32.mrf.mxu0
    %v1797 = vadd.f32 0.0, %v1796
    %1798 = vmatmul.f32.gmra.mxu0 %v1716
    %v1799 = vpop.f32.mrf.mxu0
    %v1800 = vadd.f32 0.0, %v1799
    %1801 = vmatmul.f32.gmra.mxu0 %v1718
    %v1802 = vpop.f32.mrf.mxu0
    %v1803 = vadd.f32 0.0, %v1802
    %1804 = vmatmul.f32.gmra.mxu0 %v1720
    %v1805 = vpop.f32.mrf.mxu0
    %v1806 = vadd.f32 0.0, %v1805
    %1807 = vmatmul.f32.gmra.mxu0 %v1722
    %v1808 = vpop.f32.mrf.mxu0
    %v1809 = vadd.f32 0.0, %v1808
    %1810 = vmatmul.f32.gmra.mxu0 %v1724
    %v1811 = vpop.f32.mrf.mxu0
    %v1812 = vadd.f32 0.0, %v1811
    %1813 = vmatmul.f32.gmra.mxu0 %v1726
    %v1814 = vpop.f32.mrf.mxu0
    %v1815 = vadd.f32 0.0, %v1814
    %1816 = vmatmul.f32.gmra.mxu0 %v1728
    %v1817 = vpop.f32.mrf.mxu0
    %v1818 = vadd.f32 0.0, %v1817
    %1819 = vmatmul.f32.gmra.mxu0 %v1730
    %v1820 = vpop.f32.mrf.mxu0
    %v1821 = vadd.f32 0.0, %v1820
    %1822 = vmatmul.f32.gmra.mxu0 %v1732
    %v1823 = vpop.f32.mrf.mxu0
    %v1824 = vadd.f32 0.0, %v1823
    %1825 = vmatmul.f32.gmra.mxu0 %v1734
    %v1826 = vpop.f32.mrf.mxu0
    %v1827 = vadd.f32 0.0, %v1826
    %1828 = vmatmul.f32.gmra.mxu0 %v1736
    %v1829 = vpop.f32.mrf.mxu0
    %v1830 = vadd.f32 0.0, %v1829
    %1831 = vmatmul.f32.gmra.mxu0 %v1738
    %v1832 = vpop.f32.mrf.mxu0
    %v1833 = vadd.f32 0.0, %v1832
    %1834 = vmatmul.f32.gmra.mxu0 %v1740
    %v1835 = vpop.f32.mrf.mxu0
    %v1836 = vadd.f32 0.0, %v1835
    %1837 = vmatmul.f32.gmra.mxu0 %v1742
    %v1838 = vpop.f32.mrf.mxu0
    %v1839 = vadd.f32 0.0, %v1838
    %1840 = vmatmul.f32.gmra.mxu0 %v1744
    %v1841 = vpop.f32.mrf.mxu0
    %v1842 = vadd.f32 0.0, %v1841
    %1843 = vmatmul.f32.gmra.mxu0 %v1746
    %v1844 = vpop.f32.mrf.mxu0
    %v1845 = vadd.f32 0.0, %v1844
    %1846 = vmatmul.f32.gmra.mxu0 %v1748
    %v1847 = vpop.f32.mrf.mxu0
    %v1848 = vadd.f32 0.0, %v1847
    %1849 = vmatmul.f32.gmra.mxu0 %v1750
    %v1850 = vpop.f32.mrf.mxu0
    %v1851 = vadd.f32 0.0, %v1850
    %1852 = vmatmul.f32.gmra.mxu0 %v1752
    %v1853 = vpop.f32.mrf.mxu0
    %v1854 = vadd.f32 0.0, %v1853
    %1855 = vmatmul.f32.gmra.mxu0 %v1754
    %v1856 = vpop.f32.mrf.mxu0
    %v1857 = vadd.f32 0.0, %v1856
    %1858 = vmatmul.f32.gmra.mxu0 %v1756
    %v1859 = vpop.f32.mrf.mxu0
    %v1860 = vadd.f32 0.0, %v1859
    %1861 = vmatmul.f32.gmra.mxu0 %v1758
    %v1862 = vpop.f32.mrf.mxu0
    %v1863 = vadd.f32 0.0, %v1862
    %1864 = vmatmul.f32.gmra.mxu0 %v1760
    %v1865 = vpop.f32.mrf.mxu0
    %v1866 = vadd.f32 0.0, %v1865
    %1867 = vmatmul.f32.gmra.mxu0 %v1762
    %v1868 = vpop.f32.mrf.mxu0
    %v1869 = vadd.f32 0.0, %v1868
    %1870 = vmatmul.f32.gmra.mxu0 %v1764
    %v1871 = vpop.f32.mrf.mxu0
    %v1872 = vadd.f32 0.0, %v1871
    %1873 = vmatmul.f32.gmra.mxu0 %v1766
    %v1874 = vpop.f32.mrf.mxu0
    %v1875 = vadd.f32 0.0, %v1874
    %1876 = vmatmul.f32.gmra.mxu0 %v1768
    %v1877 = vpop.f32.mrf.mxu0
    %v1878 = vadd.f32 0.0, %v1877
    %1879 = vmatmul.f32.gmra.mxu0 %v1770
    %v1880 = vpop.f32.mrf.mxu0
    %v1881 = vadd.f32 0.0, %v1880
    %1882 = vmatmul.f32.gmra.mxu0 %v1772
    %v1883 = vpop.f32.mrf.mxu0
    %v1884 = vadd.f32 0.0, %v1883
    %1885 = vmatmul.f32.gmra.mxu0 %v1774
    %v1886 = vpop.f32.mrf.mxu0
    %v1887 = vadd.f32 0.0, %v1886
    %1888 = vdwg.mxu0
    %1889 = vmatpush.msra.mxu0 %v1234
    %1890 = vmatpush.msra.mxu0 %v1233
    %1891 = vmatpush.msra.mxu0 %v1232
    %1892 = vmatpush.msra.mxu0 %v1231
    %1893 = vmatpush.msra.mxu0 %v1230
    %1894 = vmatpush.msra.mxu0 %v1229
    %1895 = vmatpush.msra.mxu0 %v1228
    %1896 = vmatpush.msra.mxu0 %v1227
    %1897 = vmatpush.msra.mxu0 %v1226
    %1898 = vmatpush.msra.mxu0 %v1225
    %1899 = vmatpush.msra.mxu0 %v1224
    %1900 = vmatpush.msra.mxu0 %v1223
    %1901 = vmatpush.msra.mxu0 %v1222
    %1902 = vmatpush.msra.mxu0 %v1221
    %1903 = vmatpush.msra.mxu0 %v1220
    %1904 = vmatpush.msra.mxu0 %v1219
    %1905 = vmatmul.f32.gmra.mxu0 %v1713
    %v1906 = vpop.f32.mrf.mxu0
    %v1907 = vadd.f32 %v1794, %v1906
    %1908 = vmatmul.f32.gmra.mxu0 %v1715
    %v1909 = vpop.f32.mrf.mxu0
    %v1910 = vadd.f32 %v1797, %v1909
    %1911 = vmatmul.f32.gmra.mxu0 %v1717
    %v1912 = vpop.f32.mrf.mxu0
    %v1913 = vadd.f32 %v1800, %v1912
    %1914 = vmatmul.f32.gmra.mxu0 %v1719
    %v1915 = vpop.f32.mrf.mxu0
    %v1916 = vadd.f32 %v1803, %v1915
    %1917 = vmatmul.f32.gmra.mxu0 %v1721
    %v1918 = vpop.f32.mrf.mxu0
    %v1919 = vadd.f32 %v1806, %v1918
    %1920 = vmatmul.f32.gmra.mxu0 %v1723
    %v1921 = vpop.f32.mrf.mxu0
    %v1922 = vadd.f32 %v1809, %v1921
    %1923 = vmatmul.f32.gmra.mxu0 %v1725
    %v1924 = vpop.f32.mrf.mxu0
    %v1925 = vadd.f32 %v1812, %v1924
    %1926 = vmatmul.f32.gmra.mxu0 %v1727
    %v1927 = vpop.f32.mrf.mxu0
    %v1928 = vadd.f32 %v1815, %v1927
    %1929 = vmatmul.f32.gmra.mxu0 %v1729
    %v1930 = vpop.f32.mrf.mxu0
    %v1931 = vadd.f32 %v1818, %v1930
    %1932 = vmatmul.f32.gmra.mxu0 %v1731
    %v1933 = vpop.f32.mrf.mxu0
    %v1934 = vadd.f32 %v1821, %v1933
    %1935 = vmatmul.f32.gmra.mxu0 %v1733
    %v1936 = vpop.f32.mrf.mxu0
    %v1937 = vadd.f32 %v1824, %v1936
    %1938 = vmatmul.f32.gmra.mxu0 %v1735
    %v1939 = vpop.f32.mrf.mxu0
    %v1940 = vadd.f32 %v1827, %v1939
    %1941 = vmatmul.f32.gmra.mxu0 %v1737
    %v1942 = vpop.f32.mrf.mxu0
    %v1943 = vadd.f32 %v1830, %v1942
    %1944 = vmatmul.f32.gmra.mxu0 %v1739
    %v1945 = vpop.f32.mrf.mxu0
    %v1946 = vadd.f32 %v1833, %v1945
    %1947 = vmatmul.f32.gmra.mxu0 %v1741
    %v1948 = vpop.f32.mrf.mxu0
    %v1949 = vadd.f32 %v1836, %v1948
    %1950 = vmatmul.f32.gmra.mxu0 %v1743
    %v1951 = vpop.f32.mrf.mxu0
    %v1952 = vadd.f32 %v1839, %v1951
    %1953 = vmatmul.f32.gmra.mxu0 %v1745
    %v1954 = vpop.f32.mrf.mxu0
    %v1955 = vadd.f32 %v1842, %v1954
    %1956 = vmatmul.f32.gmra.mxu0 %v1747
    %v1957 = vpop.f32.mrf.mxu0
    %v1958 = vadd.f32 %v1845, %v1957
    %1959 = vmatmul.f32.gmra.mxu0 %v1749
    %v1960 = vpop.f32.mrf.mxu0
    %v1961 = vadd.f32 %v1848, %v1960
    %1962 = vmatmul.f32.gmra.mxu0 %v1751
    %v1963 = vpop.f32.mrf.mxu0
    %v1964 = vadd.f32 %v1851, %v1963
    %1965 = vmatmul.f32.gmra.mxu0 %v1753
    %v1966 = vpop.f32.mrf.mxu0
    %v1967 = vadd.f32 %v1854, %v1966
    %1968 = vmatmul.f32.gmra.mxu0 %v1755
    %v1969 = vpop.f32.mrf.mxu0
    %v1970 = vadd.f32 %v1857, %v1969
    %1971 = vmatmul.f32.gmra.mxu0 %v1757
    %v1972 = vpop.f32.mrf.mxu0
    %v1973 = vadd.f32 %v1860, %v1972
    %1974 = vmatmul.f32.gmra.mxu0 %v1759
    %v1975 = vpop.f32.mrf.mxu0
    %v1976 = vadd.f32 %v1863, %v1975
    %1977 = vmatmul.f32.gmra.mxu0 %v1761
    %v1978 = vpop.f32.mrf.mxu0
    %v1979 = vadd.f32 %v1866, %v1978
    %1980 = vmatmul.f32.gmra.mxu0 %v1763
    %v1981 = vpop.f32.mrf.mxu0
    %v1982 = vadd.f32 %v1869, %v1981
    %1983 = vmatmul.f32.gmra.mxu0 %v1765
    %v1984 = vpop.f32.mrf.mxu0
    %v1985 = vadd.f32 %v1872, %v1984
    %1986 = vmatmul.f32.gmra.mxu0 %v1767
    %v1987 = vpop.f32.mrf.mxu0
    %v1988 = vadd.f32 %v1875, %v1987
    %1989 = vmatmul.f32.gmra.mxu0 %v1769
    %v1990 = vpop.f32.mrf.mxu0
    %v1991 = vadd.f32 %v1878, %v1990
    %1992 = vmatmul.f32.gmra.mxu0 %v1771
    %v1993 = vpop.f32.mrf.mxu0
    %v1994 = vadd.f32 %v1881, %v1993
    %1995 = vmatmul.f32.gmra.mxu0 %v1773
    %v1996 = vpop.f32.mrf.mxu0
    %v1997 = vadd.f32 %v1884, %v1996
    %1998 = vmatmul.f32.gmra.mxu0 %v1775
    %v1999 = vpop.f32.mrf.mxu0
    %v2000 = vadd.f32 %v1887, %v1999
    %2001 = vdwg.mxu0
    %2034 = vset.pattern.permute.xlu0 0
    %2035 = vperm.xlu0 %2034, %v1907
    %v2036 = vpop.permute.xlu0 %2035
    %2037 = vset.pattern.permute.xlu0 0
    %2038 = vperm.xlu0 %2037, %v1910
    %v2039 = vpop.permute.xlu0 %2038
    %2040 = vset.pattern.permute.xlu0 0
    %2041 = vperm.xlu0 %2040, %v1913
    %v2042 = vpop.permute.xlu0 %2041
    %2043 = vset.pattern.permute.xlu0 0
    %2044 = vperm.xlu0 %2043, %v1916
    %v2045 = vpop.permute.xlu0 %2044
    %2046 = vset.pattern.permute.xlu0 0
    %2047 = vperm.xlu0 %2046, %v1919
    %v2048 = vpop.permute.xlu0 %2047
    %2049 = vset.pattern.permute.xlu0 0
    %2050 = vperm.xlu0 %2049, %v1922
    %v2051 = vpop.permute.xlu0 %2050
    %2052 = vset.pattern.permute.xlu0 0
    %2053 = vperm.xlu0 %2052, %v1925
    %v2054 = vpop.permute.xlu0 %2053
    %2055 = vset.pattern.permute.xlu0 0
    %2056 = vperm.xlu0 %2055, %v1928
    %v2057 = vpop.permute.xlu0 %2056
    %2058 = vset.pattern.permute.xlu0 0
    %2059 = vperm.xlu0 %2058, %v1931
    %v2060 = vpop.permute.xlu0 %2059
    %2061 = vset.pattern.permute.xlu0 0
    %2062 = vperm.xlu0 %2061, %v1934
    %v2063 = vpop.permute.xlu0 %2062
    %2064 = vset.pattern.permute.xlu0 0
    %2065 = vperm.xlu0 %2064, %v1937
    %v2066 = vpop.permute.xlu0 %2065
    %2067 = vset.pattern.permute.xlu0 0
    %2068 = vperm.xlu0 %2067, %v1940
    %v2069 = vpop.permute.xlu0 %2068
    %2070 = vset.pattern.permute.xlu0 0
    %2071 = vperm.xlu0 %2070, %v1943
    %v2072 = vpop.permute.xlu0 %2071
    %2073 = vset.pattern.permute.xlu0 0
    %2074 = vperm.xlu0 %2073, %v1946
    %v2075 = vpop.permute.xlu0 %2074
    %2076 = vset.pattern.permute.xlu0 0
    %2077 = vperm.xlu0 %2076, %v1949
    %v2078 = vpop.permute.xlu0 %2077
    %2079 = vset.pattern.permute.xlu0 0
    %2080 = vperm.xlu0 %2079, %v1952
    %v2081 = vpop.permute.xlu0 %2080
    %2082 = vset.pattern.permute.xlu0 0
    %2083 = vperm.xlu0 %2082, %v1955
    %v2084 = vpop.permute.xlu0 %2083
    %2085 = vset.pattern.permute.xlu0 0
    %2086 = vperm.xlu0 %2085, %v1958
    %v2087 = vpop.permute.xlu0 %2086
    %2088 = vset.pattern.permute.xlu0 0
    %2089 = vperm.xlu0 %2088, %v1961
    %v2090 = vpop.permute.xlu0 %2089
    %2091 = vset.pattern.permute.xlu0 0
    %2092 = vperm.xlu0 %2091, %v1964
    %v2093 = vpop.permute.xlu0 %2092
    %2094 = vset.pattern.permute.xlu0 0
    %2095 = vperm.xlu0 %2094, %v1967
    %v2096 = vpop.permute.xlu0 %2095
    %2097 = vset.pattern.permute.xlu0 0
    %2098 = vperm.xlu0 %2097, %v1970
    %v2099 = vpop.permute.xlu0 %2098
    %2100 = vset.pattern.permute.xlu0 0
    %2101 = vperm.xlu0 %2100, %v1973
    %v2102 = vpop.permute.xlu0 %2101
    %2103 = vset.pattern.permute.xlu0 0
    %2104 = vperm.xlu0 %2103, %v1976
    %v2105 = vpop.permute.xlu0 %2104
    %2106 = vset.pattern.permute.xlu0 0
    %2107 = vperm.xlu0 %2106, %v1979
    %v2108 = vpop.permute.xlu0 %2107
    %2109 = vset.pattern.permute.xlu0 0
    %2110 = vperm.xlu0 %2109, %v1982
    %v2111 = vpop.permute.xlu0 %2110
    %2112 = vset.pattern.permute.xlu0 0
    %2113 = vperm.xlu0 %2112, %v1985
    %v2114 = vpop.permute.xlu0 %2113
    %2115 = vset.pattern.permute.xlu0 0
    %2116 = vperm.xlu0 %2115, %v1988
    %v2117 = vpop.permute.xlu0 %2116
    %2118 = vset.pattern.permute.xlu0 0
    %2119 = vperm.xlu0 %2118, %v1991
    %v2120 = vpop.permute.xlu0 %2119
    %2121 = vset.pattern.permute.xlu0 0
    %2122 = vperm.xlu0 %2121, %v1994
    %v2123 = vpop.permute.xlu0 %2122
    %2124 = vset.pattern.permute.xlu0 0
    %2125 = vperm.xlu0 %2124, %v1997
    %v2126 = vpop.permute.xlu0 %2125
    %2127 = vset.pattern.permute.xlu0 0
    %2128 = vperm.xlu0 %2127, %v2000
    %v2129 = vpop.permute.xlu0 %2128
    %v2130 = vperm.slane %v2036, %v919
    %v2131 = vperm.slane %v2039, %v921
    %v2132 = vsel %vm923, %v2131, %v2130
    %v2133 = vperm.slane %v2042, %v919
    %v2134 = vperm.slane %v2045, %v921
    %v2135 = vsel %vm923, %v2134, %v2133
    %v2136 = vperm.slane %v2048, %v919
    %v2137 = vperm.slane %v2051, %v921
    %v2138 = vsel %vm923, %v2137, %v2136
    %v2139 = vperm.slane %v2054, %v919
    %v2140 = vperm.slane %v2057, %v921
    %v2141 = vsel %vm923, %v2140, %v2139
    %v2142 = vperm.slane %v2060, %v919
    %v2143 = vperm.slane %v2063, %v921
    %v2144 = vsel %vm923, %v2143, %v2142
    %v2145 = vperm.slane %v2066, %v919
    %v2146 = vperm.slane %v2069, %v921
    %v2147 = vsel %vm923, %v2146, %v2145
    %v2148 = vperm.slane %v2072, %v919
    %v2149 = vperm.slane %v2075, %v921
    %v2150 = vsel %vm923, %v2149, %v2148
    %v2151 = vperm.slane %v2078, %v919
    %v2152 = vperm.slane %v2081, %v921
    %v2153 = vsel %vm923, %v2152, %v2151
    %v2154 = vperm.slane %v2084, %v919
    %v2155 = vperm.slane %v2087, %v921
    %v2156 = vsel %vm923, %v2155, %v2154
    %v2157 = vperm.slane %v2090, %v919
    %v2158 = vperm.slane %v2093, %v921
    %v2159 = vsel %vm923, %v2158, %v2157
    %v2160 = vperm.slane %v2096, %v919
    %v2161 = vperm.slane %v2099, %v921
    %v2162 = vsel %vm923, %v2161, %v2160
    %v2163 = vperm.slane %v2102, %v919
    %v2164 = vperm.slane %v2105, %v921
    %v2165 = vsel %vm923, %v2164, %v2163
    %v2166 = vperm.slane %v2108, %v919
    %v2167 = vperm.slane %v2111, %v921
    %v2168 = vsel %vm923, %v2167, %v2166
    %v2169 = vperm.slane %v2114, %v919
    %v2170 = vperm.slane %v2117, %v921
    %v2171 = vsel %vm923, %v2170, %v2169
    %v2172 = vperm.slane %v2120, %v919
    %v2173 = vperm.slane %v2123, %v921
    %v2174 = vsel %vm923, %v2173, %v2172
    %v2175 = vperm.slane %v2126, %v919
    %v2176 = vperm.slane %v2129, %v921
    %v2177 = vsel %vm923, %v2176, %v2175
    %v2178 = vsel %vm206, %v2135, %v2132
    %v2179 = vsel %vm209, %v2138, %v2178
    %v2180 = vsel %vm212, %v2141, %v2179
    %v2181 = vsel %vm215, %v2144, %v2180
    %v2182 = vsel %vm218, %v2147, %v2181
    %v2183 = vsel %vm221, %v2150, %v2182
    %v2184 = vsel %vm976, %v2153, %v2183
    %v2185 = vsel %vm206, %v2159, %v2156
    %v2186 = vsel %vm209, %v2162, %v2185
    %v2187 = vsel %vm212, %v2165, %v2186
    %v2188 = vsel %vm215, %v2168, %v2187
    %v2189 = vsel %vm218, %v2171, %v2188
    %v2190 = vsel %vm221, %v2174, %v2189
    %v2191 = vsel %vm976, %v2177, %v2190
    %v2194 = vsel %vm788, %v2184, -1e+30
    %v2195 = vsel %vm789, %v2191, -1e+30
    %v2196 = vsel %vm989, %v2194, -inf
    %2197 = vmax.xlane.f32.xlu0 %v2196
    %v2198 = vpop.xlane.xlu0 %2197
    %v2199 = vsel %vm989, %v2195, -inf
    %2200 = vmax.xlane.f32.xlu0 %v2199
    %v2201 = vpop.xlane.xlu0 %2200
    %v2202 = vsub.f32 %v2194, %v2198
    %v2203 = vsub.f32 %v2195, %v2201
    %v2204 = vmul.f32 %v2202, 1.442695
    %v2205 = vpow.pop %v2204
    %v2206 = vmul.f32 %v2203, 1.442695
    %v2207 = vpow.pop %v2206
    %v2208 = vsel %vm989, %v2205, 0.0
    %2209 = vadd.xlane.f32.xlu0 %v2208
    %v2210 = vpop.xlane.xlu0 %2209
    %v2211 = vsel %vm989, %v2207, 0.0
    %2212 = vadd.xlane.f32.xlu0 %v2211
    %v2213 = vpop.xlane.xlu0 %2212
    %v2214 = vmax.f32 %v2210, 1e-20
    %v2215 = vmax.f32 %v2213, 1e-20
    %v2216 = vrcp.pop %v2214
    %v2217 = vrcp.pop %v2215
    %v2218 = vmul.f32 %v2205, %v2216
    %v2219 = vmul.f32 %v2207, %v2217
    %v2221 = vperm.slane %v1235, 0
    %v2222 = vperm.slane %v1235, 1
    %v2226 = vsel %vm989, %v2218, 0
    %v2229 = vsel %vm989, %v2219, 0
    %2231 = vmatpush.msra.mxu0 0.0
    %2232 = vmatpush.msra.mxu0 0.0
    %2233 = vmatpush.msra.mxu0 0.0
    %2234 = vmatpush.msra.mxu0 0.0
    %2235 = vmatpush.msra.mxu0 0.0
    %2236 = vmatpush.msra.mxu0 0.0
    %2237 = vmatpush.msra.mxu0 0.0
    %2238 = vmatpush.msra.mxu0 0.0
    %2239 = vmatpush.msra.mxu0 0.0
    %2240 = vmatpush.msra.mxu0 0.0
    %2241 = vmatpush.msra.mxu0 0.0
    %2242 = vmatpush.msra.mxu0 0.0
    %2243 = vmatpush.msra.mxu0 0.0
    %2244 = vmatpush.msra.mxu0 0.0
    %2245 = vmatpush.msra.mxu0 %v1280
    %2246 = vmatpush.msra.mxu0 %v1277
    %2247 = vmatmul.f32.gmra.mxu0 %v2226
    %v2248 = vpop.f32.mrf.mxu0
    %v2249 = vadd.f32 %v2221, %v2248
    %2250 = vmatmul.f32.gmra.mxu0 %v2229
    %v2251 = vpop.f32.mrf.mxu0
    %v2252 = vadd.f32 %v2221, %v2251
    %2253 = vdwg.mxu0
    %2254 = vmatpush.msra.mxu0 0.0
    %2255 = vmatpush.msra.mxu0 0.0
    %2256 = vmatpush.msra.mxu0 0.0
    %2257 = vmatpush.msra.mxu0 0.0
    %2258 = vmatpush.msra.mxu0 0.0
    %2259 = vmatpush.msra.mxu0 0.0
    %2260 = vmatpush.msra.mxu0 0.0
    %2261 = vmatpush.msra.mxu0 0.0
    %2262 = vmatpush.msra.mxu0 0.0
    %2263 = vmatpush.msra.mxu0 0.0
    %2264 = vmatpush.msra.mxu0 0.0
    %2265 = vmatpush.msra.mxu0 0.0
    %2266 = vmatpush.msra.mxu0 0.0
    %2267 = vmatpush.msra.mxu0 0.0
    %2268 = vmatpush.msra.mxu0 %v1326
    %2269 = vmatpush.msra.mxu0 %v1323
    %2270 = vmatmul.f32.gmra.mxu0 %v2226
    %v2271 = vpop.f32.mrf.mxu0
    %v2272 = vadd.f32 %v2222, %v2271
    %2273 = vmatmul.f32.gmra.mxu0 %v2229
    %v2274 = vpop.f32.mrf.mxu0
    %v2275 = vadd.f32 %v2222, %v2274
    %2276 = vdwg.mxu0
    %2277 = vst [vmem:[#allocation5] sm:$0xff] %v2249
    %2278 = vst [vmem:[#allocation5 + $0x8] sm:$0xff] %v2272
    %2279 = vst [vmem:[#allocation5 + $0x10] sm:$0xff] %v2252
    %2280 = vst [vmem:[#allocation5 + $0x18] sm:$0xff] %v2275
    // Predicated region
    $region38: #{tpu_custom_call.1} parent=1 // pred_check
      _
    $region39: #{tpu_custom_call.1} parent=1 // pred_check_branch
      %2282 = sbr.rel (0) target = $region41
    $region40: #{tpu_custom_call.1} parent=1 // pred_region
      %2284 = vsyncadd [#allocation4], 0
      %s2285 = sshll.u32 [#allocation5], 4
      %s2286 = int_to_ptr.vmem [resolvable:$true] %s2285
      %s2287 = sshll.u32 %s8, 4
      %s2288 = int_to_ptr.hbm [resolvable:$true] %s2287
      %2293 = dma.vmem_to_hbm [thread:$0]  %s2286, 512, %s2288, [#allocation4], 256, 256, 16
    $region41: #{tpu_custom_call.1} parent=1 // pred_fallthru
      _
    // Predicated region
    $region42: #{tpu_custom_call.1} parent=1 // pred_check
      _
    $region43: #{tpu_custom_call.1} parent=1 // pred_check_branch
      %2295 = sbr.rel (0) target = $region45
    $region44: #{tpu_custom_call.1} parent=1 // pred_region
      %2297 = dma.done [#allocation4], 512
    $region45: #{tpu_custom_call.1} parent=1 // pred_fallthru
      _
    %2298 = vsyncpa [#allocation3], 1
    %2299 = vsyncpa [#allocation4], 1

</llo_original>
